<compile_context>
chip_gen: v5e
topology: v5e:2x2
jax: 0.10.0
libtpu: 0.0.40
codegen_flags: <defaults>
</compile_context>

<pallas_src>
import functools

import jax
import jax.numpy as jnp
from jax import lax
from jax.experimental import pallas as pl
from jax.experimental.pallas import tpu as pltpu


NBUF = 2  # staging-buffer depth; each buffer carries TB in-flight row DMAs


def _logreg_kernel(ids_ref, w_ref, b_ref, emb_ref, out_ref,
                   acc_ref, buf_ref, sem_ref, *, seq_len, block_b, inv_len):
    """One grid step = one block of `block_b` batch rows.

    ids_ref : SMEM (B_pad*L,) int32   -- scalar-prefetched flat token ids
    w_ref   : VMEM (1, D)     f32     -- nn.Linear(D, 1).weight (resident)
    b_ref   : SMEM (1,)       f32     -- nn.Linear(D, 1).bias
    emb_ref : HBM  (V, D)     f32     -- embedding matrix (manual DMA gather source)
    out_ref : VMEM (TB, 128)  f32     -- lane-dense output slab for this batch block
    acc_ref : VMEM (TB, D)    f32     -- running sum of gathered embedding rows
    buf_ref : VMEM (NBUF, TB, D) f32  -- DMA staging buffers (one sublane row per DMA)
    sem_ref : DMA sems (NBUF, TB)
    """
    base = pl.program_id(0) * block_b              # first (padded) batch row of the block

    def fetch(l, slot):
        # One row DMA per batch row of the block -> different sublane of buf[slot].
        for tb in range(block_b):
            tok = ids_ref[(base + tb) * seq_len + l]
            pltpu.make_async_copy(emb_ref.at[tok],
                                  buf_ref.at[slot, tb],
                                  sem_ref.at[slot, tb]).start()

    def wait_group(slot):
        for tb in range(block_b):
            pltpu.make_async_copy(emb_ref.at[0],
                                  buf_ref.at[slot, tb],
                                  sem_ref.at[slot, tb]).wait()

    fetch(0, 0)                                    # prime buffer 0
    acc_ref[...] = jnp.zeros_like(acc_ref)

    def body(l, carry):
        slot = l % NBUF
        wait_group(slot)                           # rows for position l are resident

        @pl.when(l + 1 < seq_len)                  # prefetch position l+1 into the other buffer
        def _():
            fetch(l + 1, (l + 1) % NBUF)

        acc_ref[...] += buf_ref[slot]              # one full-vreg (TB, D) add
        return carry

    lax.fori_loop(0, seq_len, body, 0)

    # Finalize: mean over L, then Linear(D, 1) as a VPU multiply + lane reduce.
    mean_emb = acc_ref[...] * inv_len                                           # (TB, D)
    logits = jnp.sum(mean_emb * w_ref[...], axis=1, keepdims=True) + b_ref[0]   # (TB, 1)
    # Lane-dense store (unmasked vst); wrapper slices column 0.
    out_ref[...] = jnp.broadcast_to(logits, out_ref.shape).astype(out_ref.dtype)


def logistic_regression_forward(x, emb, w, b, *, block_b=8):
    """x: (B, L) int token ids, emb: (V, D) f32, w: (1, D) f32, b: (1,) f32 -> (B, 1) f32."""
    B, L = x.shape
    V, D = emb.shape

    # Pad the batch to a multiple of the batch block (padded rows gather token 0 and
    # are discarded).  With B >= 2*block_b the "parallel" axis has >= 2 blocks, so
    # v7x's two TensorCores both get work; on v5e/v6e this is perf-neutral.
    b_pad = ((B + block_b - 1) // block_b) * block_b
    x_pad = jnp.zeros((b_pad, L), jnp.int32).at[:B].set(x.astype(jnp.int32))
    ids_flat = x_pad.reshape(b_pad * L)            # 1-D ids: SMEM pads to next_pow2(4N) bytes

    kernel = functools.partial(_logreg_kernel, seq_len=L, block_b=block_b,
                               inv_len=1.0 / L)

    out_slab = pl.pallas_call(
        kernel,
        out_shape=jax.ShapeDtypeStruct((b_pad, 128), jnp.float32),
        grid_spec=pltpu.PrefetchScalarGridSpec(
            num_scalar_prefetch=1,                 # flat token ids -> SMEM
            grid=(b_pad // block_b,),              # one step per batch block; seq loop in-kernel
            in_specs=[
                pl.BlockSpec((1, D), lambda bb, ids: (0, 0)),       # W: resident (1, D) block
                pl.BlockSpec(memory_space=pltpu.MemorySpace.SMEM),  # bias scalar
                pl.BlockSpec(memory_space=pl.ANY),                  # E stays in HBM (manual gather)
            ],
            out_specs=pl.BlockSpec((block_b, 128), lambda bb, ids: (bb, 0)),
            scratch_shapes=[
                pltpu.VMEM((block_b, D), jnp.float32),              # accumulator
                pltpu.VMEM((NBUF, block_b, D), jnp.float32),        # DMA staging buffers
                pltpu.SemaphoreType.DMA((NBUF, block_b)),           # one sem per in-flight row
            ],
        ),
        compiler_params=pltpu.CompilerParams(
            dimension_semantics=("parallel",),     # independent batch blocks
            vmem_limit_bytes=32 * 1024 * 1024,     # explicit; actual use is a few KB
        ),
    )(ids_flat, w, b, emb)

    return out_slab[:B, :1]                        # (B, 1)


if __name__ == "__main__":
    key = jax.random.PRNGKey(0)
    k_emb, k_w, k_b, k_idx = jax.random.split(key, 4)

    V, D = 64, 128    # vocab size, embedding dim (small demo shapes)
    B, L = 4, 8       # batch, sequence length

    # Deterministic synthetic parameters (shapes implied by the module __init__).
    emb = jax.random.normal(k_emb, (V, D), dtype=jnp.float32)        # embedding_matrix
    w = jax.random.normal(k_w, (1, D), dtype=jnp.float32) * 0.1      # nn.Linear(D, 1).weight
    b = jax.random.normal(k_b, (1,), dtype=jnp.float32) * 0.1        # nn.Linear(D, 1).bias
    x = jax.random.randint(k_idx, (B, L), 0, V, dtype=jnp.int32)     # token ids

    out = logistic_regression_forward(x, emb, w, b)
    out = jax.block_until_ready(out)

    # Pure-JAX reference of the PyTorch forward.
    ref = jnp.mean(emb[x], axis=1) @ w.T + b
    assert out.shape == (B, 1)
    assert jnp.allclose(out, ref, atol=1e-4, rtol=1e-4), (out, ref)

    print("KERNEL_OK")
</pallas_src>

<mosaic_0001>
module attributes {stable_mosaic.version = 11 : i64} {
  func.func @_logreg_kernel(%arg0: i32, %arg1: memref<64xi32, #tpu.memory_space<smem>>, %arg2: memref<1x128xf32, #tpu.memory_space<vmem>>, %arg3: memref<1xf32, #tpu.memory_space<smem>>, %arg4: memref<64x128xf32, #tpu.memory_space<any>>, %arg5: memref<8x128xf32, #tpu.memory_space<vmem>>, %arg6: memref<8x128xf32, #tpu.memory_space<vmem>>, %arg7: memref<2x8x128xf32, #tpu.memory_space<vmem>>, %arg8: memref<2x8x!tpu.dma_semaphore, #tpu.memory_space<semaphore_mem>>) attributes {dimension_semantics = [#tpu.dimension_semantics<parallel>], iteration_bounds = array<i64: 1>, scalar_prefetch = 1 : i64, scratch_operands = 3 : i64, tpu.core_type = #tpu.core_type<tc>, window_params = [{pipeline_mode = #tpu.pipeline_mode<synchronous>, transform_indices = @transform_0, window_bounds = array<i64: 1, 128>}, {transform_indices = @transform_1, window_bounds = array<i64: 1>}, {}, {transform_indices = @transform_3, window_bounds = array<i64: 8, 128>}]} {
    %c8_i32 = arith.constant 8 : i32
    %0 = arith.muli %arg0, %c8_i32 : i32
    %c0_i32 = arith.constant 0 : i32
    %1 = arith.addi %0, %c0_i32 : i32
    %c8_i32_0 = arith.constant 8 : i32
    %2 = arith.muli %1, %c8_i32_0 : i32
    %c0_i32_1 = arith.constant 0 : i32
    %3 = arith.addi %2, %c0_i32_1 : i32
    %4 = arith.index_cast %3 : i32 to index
    %5 = memref.load %arg1[%4] : memref<64xi32, #tpu.memory_space<smem>>
    %c0_i32_2 = arith.constant 0 : i32
    %c0_i32_3 = arith.constant 0 : i32
    %c0_i32_4 = arith.constant 0 : i32
    %c0_i32_5 = arith.constant 0 : i32
    %c0_i32_6 = arith.constant 0 : i32
    %6 = tpu.memref_slice %arg4[%5, %c0_i32_6] : memref<64x128xf32, #tpu.memory_space<any>> -> memref<1x128xf32, #tpu.memory_space<any>>
    %7 = tpu.memref_squeeze %6 : memref<1x128xf32, #tpu.memory_space<any>> -> memref<128xf32, #tpu.memory_space<any>>
    %c0_i32_7 = arith.constant 0 : i32
    %8 = tpu.memref_slice %arg7[%c0_i32_2, %c0_i32_3, %c0_i32_7] : memref<2x8x128xf32, #tpu.memory_space<vmem>> -> memref<1x1x128xf32, #tpu.memory_space<vmem>>
    %9 = tpu.memref_squeeze %8 : memref<1x1x128xf32, #tpu.memory_space<vmem>> -> memref<128xf32, #tpu.memory_space<vmem>>
    %10 = tpu.memref_slice %arg8[%c0_i32_4, %c0_i32_5] : memref<2x8x!tpu.dma_semaphore, #tpu.memory_space<semaphore_mem>> -> memref<1x1x!tpu.dma_semaphore, #tpu.memory_space<semaphore_mem>>
    %11 = tpu.memref_squeeze %10 : memref<1x1x!tpu.dma_semaphore, #tpu.memory_space<semaphore_mem>> -> memref<!tpu.dma_semaphore, #tpu.memory_space<semaphore_mem>>
    tpu.enqueue_dma source(%7 : memref<128xf32, #tpu.memory_space<any>>) target(%9 : memref<128xf32, #tpu.memory_space<vmem>>) target_semaphore(%11 : memref<!tpu.dma_semaphore, #tpu.memory_space<semaphore_mem>>)
    %c1_i32 = arith.constant 1 : i32
    %12 = arith.addi %0, %c1_i32 : i32
    %c8_i32_8 = arith.constant 8 : i32
    %13 = arith.muli %12, %c8_i32_8 : i32
    %c0_i32_9 = arith.constant 0 : i32
    %14 = arith.addi %13, %c0_i32_9 : i32
    %15 = arith.index_cast %14 : i32 to index
    %16 = memref.load %arg1[%15] : memref<64xi32, #tpu.memory_space<smem>>
    %c0_i32_10 = arith.constant 0 : i32
    %c1_i32_11 = arith.constant 1 : i32
    %c0_i32_12 = arith.constant 0 : i32
    %c1_i32_13 = arith.constant 1 : i32
    %c0_i32_14 = arith.constant 0 : i32
    %17 = tpu.memref_slice %arg4[%16, %c0_i32_14] : memref<64x128xf32, #tpu.memory_space<any>> -> memref<1x128xf32, #tpu.memory_space<any>>
    %18 = tpu.memref_squeeze %17 : memref<1x128xf32, #tpu.memory_space<any>> -> memref<128xf32, #tpu.memory_space<any>>
    %c0_i32_15 = arith.constant 0 : i32
    %19 = tpu.memref_slice %arg7[%c0_i32_10, %c1_i32_11, %c0_i32_15] : memref<2x8x128xf32, #tpu.memory_space<vmem>> -> memref<1x1x128xf32, #tpu.memory_space<vmem>>
    %20 = tpu.memref_squeeze %19 : memref<1x1x128xf32, #tpu.memory_space<vmem>> -> memref<128xf32, #tpu.memory_space<vmem>>
    %21 = tpu.memref_slice %arg8[%c0_i32_12, %c1_i32_13] : memref<2x8x!tpu.dma_semaphore, #tpu.memory_space<semaphore_mem>> -> memref<1x1x!tpu.dma_semaphore, #tpu.memory_space<semaphore_mem>>
    %22 = tpu.memref_squeeze %21 : memref<1x1x!tpu.dma_semaphore, #tpu.memory_space<semaphore_mem>> -> memref<!tpu.dma_semaphore, #tpu.memory_space<semaphore_mem>>
    tpu.enqueue_dma source(%18 : memref<128xf32, #tpu.memory_space<any>>) target(%20 : memref<128xf32, #tpu.memory_space<vmem>>) target_semaphore(%22 : memref<!tpu.dma_semaphore, #tpu.memory_space<semaphore_mem>>)
    %c2_i32 = arith.constant 2 : i32
    %23 = arith.addi %0, %c2_i32 : i32
    %c8_i32_16 = arith.constant 8 : i32
    %24 = arith.muli %23, %c8_i32_16 : i32
    %c0_i32_17 = arith.constant 0 : i32
    %25 = arith.addi %24, %c0_i32_17 : i32
    %26 = arith.index_cast %25 : i32 to index
    %27 = memref.load %arg1[%26] : memref<64xi32, #tpu.memory_space<smem>>
    %c0_i32_18 = arith.constant 0 : i32
    %c2_i32_19 = arith.constant 2 : i32
    %c0_i32_20 = arith.constant 0 : i32
    %c2_i32_21 = arith.constant 2 : i32
    %c0_i32_22 = arith.constant 0 : i32
    %28 = tpu.memref_slice %arg4[%27, %c0_i32_22] : memref<64x128xf32, #tpu.memory_space<any>> -> memref<1x128xf32, #tpu.memory_space<any>>
    %29 = tpu.memref_squeeze %28 : memref<1x128xf32, #tpu.memory_space<any>> -> memref<128xf32, #tpu.memory_space<any>>
    %c0_i32_23 = arith.constant 0 : i32
    %30 = tpu.memref_slice %arg7[%c0_i32_18, %c2_i32_19, %c0_i32_23] : memref<2x8x128xf32, #tpu.memory_space<vmem>> -> memref<1x1x128xf32, #tpu.memory_space<vmem>>
    %31 = tpu.memref_squeeze %30 : memref<1x1x128xf32, #tpu.memory_space<vmem>> -> memref<128xf32, #tpu.memory_space<vmem>>
    %32 = tpu.memref_slice %arg8[%c0_i32_20, %c2_i32_21] : memref<2x8x!tpu.dma_semaphore, #tpu.memory_space<semaphore_mem>> -> memref<1x1x!tpu.dma_semaphore, #tpu.memory_space<semaphore_mem>>
    %33 = tpu.memref_squeeze %32 : memref<1x1x!tpu.dma_semaphore, #tpu.memory_space<semaphore_mem>> -> memref<!tpu.dma_semaphore, #tpu.memory_space<semaphore_mem>>
    tpu.enqueue_dma source(%29 : memref<128xf32, #tpu.memory_space<any>>) target(%31 : memref<128xf32, #tpu.memory_space<vmem>>) target_semaphore(%33 : memref<!tpu.dma_semaphore, #tpu.memory_space<semaphore_mem>>)
    %c3_i32 = arith.constant 3 : i32
    %34 = arith.addi %0, %c3_i32 : i32
    %c8_i32_24 = arith.constant 8 : i32
    %35 = arith.muli %34, %c8_i32_24 : i32
    %c0_i32_25 = arith.constant 0 : i32
    %36 = arith.addi %35, %c0_i32_25 : i32
    %37 = arith.index_cast %36 : i32 to index
    %38 = memref.load %arg1[%37] : memref<64xi32, #tpu.memory_space<smem>>
    %c0_i32_26 = arith.constant 0 : i32
    %c3_i32_27 = arith.constant 3 : i32
    %c0_i32_28 = arith.constant 0 : i32
    %c3_i32_29 = arith.constant 3 : i32
    %c0_i32_30 = arith.constant 0 : i32
    %39 = tpu.memref_slice %arg4[%38, %c0_i32_30] : memref<64x128xf32, #tpu.memory_space<any>> -> memref<1x128xf32, #tpu.memory_space<any>>
    %40 = tpu.memref_squeeze %39 : memref<1x128xf32, #tpu.memory_space<any>> -> memref<128xf32, #tpu.memory_space<any>>
    %c0_i32_31 = arith.constant 0 : i32
    %41 = tpu.memref_slice %arg7[%c0_i32_26, %c3_i32_27, %c0_i32_31] : memref<2x8x128xf32, #tpu.memory_space<vmem>> -> memref<1x1x128xf32, #tpu.memory_space<vmem>>
    %42 = tpu.memref_squeeze %41 : memref<1x1x128xf32, #tpu.memory_space<vmem>> -> memref<128xf32, #tpu.memory_space<vmem>>
    %43 = tpu.memref_slice %arg8[%c0_i32_28, %c3_i32_29] : memref<2x8x!tpu.dma_semaphore, #tpu.memory_space<semaphore_mem>> -> memref<1x1x!tpu.dma_semaphore, #tpu.memory_space<semaphore_mem>>
    %44 = tpu.memref_squeeze %43 : memref<1x1x!tpu.dma_semaphore, #tpu.memory_space<semaphore_mem>> -> memref<!tpu.dma_semaphore, #tpu.memory_space<semaphore_mem>>
    tpu.enqueue_dma source(%40 : memref<128xf32, #tpu.memory_space<any>>) target(%42 : memref<128xf32, #tpu.memory_space<vmem>>) target_semaphore(%44 : memref<!tpu.dma_semaphore, #tpu.memory_space<semaphore_mem>>)
    %c4_i32 = arith.constant 4 : i32
    %45 = arith.addi %0, %c4_i32 : i32
    %c8_i32_32 = arith.constant 8 : i32
    %46 = arith.muli %45, %c8_i32_32 : i32
    %c0_i32_33 = arith.constant 0 : i32
    %47 = arith.addi %46, %c0_i32_33 : i32
    %48 = arith.index_cast %47 : i32 to index
    %49 = memref.load %arg1[%48] : memref<64xi32, #tpu.memory_space<smem>>
    %c0_i32_34 = arith.constant 0 : i32
    %c4_i32_35 = arith.constant 4 : i32
    %c0_i32_36 = arith.constant 0 : i32
    %c4_i32_37 = arith.constant 4 : i32
    %c0_i32_38 = arith.constant 0 : i32
    %50 = tpu.memref_slice %arg4[%49, %c0_i32_38] : memref<64x128xf32, #tpu.memory_space<any>> -> memref<1x128xf32, #tpu.memory_space<any>>
    %51 = tpu.memref_squeeze %50 : memref<1x128xf32, #tpu.memory_space<any>> -> memref<128xf32, #tpu.memory_space<any>>
    %c0_i32_39 = arith.constant 0 : i32
    %52 = tpu.memref_slice %arg7[%c0_i32_34, %c4_i32_35, %c0_i32_39] : memref<2x8x128xf32, #tpu.memory_space<vmem>> -> memref<1x1x128xf32, #tpu.memory_space<vmem>>
    %53 = tpu.memref_squeeze %52 : memref<1x1x128xf32, #tpu.memory_space<vmem>> -> memref<128xf32, #tpu.memory_space<vmem>>
    %54 = tpu.memref_slice %arg8[%c0_i32_36, %c4_i32_37] : memref<2x8x!tpu.dma_semaphore, #tpu.memory_space<semaphore_mem>> -> memref<1x1x!tpu.dma_semaphore, #tpu.memory_space<semaphore_mem>>
    %55 = tpu.memref_squeeze %54 : memref<1x1x!tpu.dma_semaphore, #tpu.memory_space<semaphore_mem>> -> memref<!tpu.dma_semaphore, #tpu.memory_space<semaphore_mem>>
    tpu.enqueue_dma source(%51 : memref<128xf32, #tpu.memory_space<any>>) target(%53 : memref<128xf32, #tpu.memory_space<vmem>>) target_semaphore(%55 : memref<!tpu.dma_semaphore, #tpu.memory_space<semaphore_mem>>)
    %c5_i32 = arith.constant 5 : i32
    %56 = arith.addi %0, %c5_i32 : i32
    %c8_i32_40 = arith.constant 8 : i32
    %57 = arith.muli %56, %c8_i32_40 : i32
    %c0_i32_41 = arith.constant 0 : i32
    %58 = arith.addi %57, %c0_i32_41 : i32
    %59 = arith.index_cast %58 : i32 to index
    %60 = memref.load %arg1[%59] : memref<64xi32, #tpu.memory_space<smem>>
    %c0_i32_42 = arith.constant 0 : i32
    %c5_i32_43 = arith.constant 5 : i32
    %c0_i32_44 = arith.constant 0 : i32
    %c5_i32_45 = arith.constant 5 : i32
    %c0_i32_46 = arith.constant 0 : i32
    %61 = tpu.memref_slice %arg4[%60, %c0_i32_46] : memref<64x128xf32, #tpu.memory_space<any>> -> memref<1x128xf32, #tpu.memory_space<any>>
    %62 = tpu.memref_squeeze %61 : memref<1x128xf32, #tpu.memory_space<any>> -> memref<128xf32, #tpu.memory_space<any>>
    %c0_i32_47 = arith.constant 0 : i32
    %63 = tpu.memref_slice %arg7[%c0_i32_42, %c5_i32_43, %c0_i32_47] : memref<2x8x128xf32, #tpu.memory_space<vmem>> -> memref<1x1x128xf32, #tpu.memory_space<vmem>>
    %64 = tpu.memref_squeeze %63 : memref<1x1x128xf32, #tpu.memory_space<vmem>> -> memref<128xf32, #tpu.memory_space<vmem>>
    %65 = tpu.memref_slice %arg8[%c0_i32_44, %c5_i32_45] : memref<2x8x!tpu.dma_semaphore, #tpu.memory_space<semaphore_mem>> -> memref<1x1x!tpu.dma_semaphore, #tpu.memory_space<semaphore_mem>>
    %66 = tpu.memref_squeeze %65 : memref<1x1x!tpu.dma_semaphore, #tpu.memory_space<semaphore_mem>> -> memref<!tpu.dma_semaphore, #tpu.memory_space<semaphore_mem>>
    tpu.enqueue_dma source(%62 : memref<128xf32, #tpu.memory_space<any>>) target(%64 : memref<128xf32, #tpu.memory_space<vmem>>) target_semaphore(%66 : memref<!tpu.dma_semaphore, #tpu.memory_space<semaphore_mem>>)
    %c6_i32 = arith.constant 6 : i32
    %67 = arith.addi %0, %c6_i32 : i32
    %c8_i32_48 = arith.constant 8 : i32
    %68 = arith.muli %67, %c8_i32_48 : i32
    %c0_i32_49 = arith.constant 0 : i32
    %69 = arith.addi %68, %c0_i32_49 : i32
    %70 = arith.index_cast %69 : i32 to index
    %71 = memref.load %arg1[%70] : memref<64xi32, #tpu.memory_space<smem>>
    %c0_i32_50 = arith.constant 0 : i32
    %c6_i32_51 = arith.constant 6 : i32
    %c0_i32_52 = arith.constant 0 : i32
    %c6_i32_53 = arith.constant 6 : i32
    %c0_i32_54 = arith.constant 0 : i32
    %72 = tpu.memref_slice %arg4[%71, %c0_i32_54] : memref<64x128xf32, #tpu.memory_space<any>> -> memref<1x128xf32, #tpu.memory_space<any>>
    %73 = tpu.memref_squeeze %72 : memref<1x128xf32, #tpu.memory_space<any>> -> memref<128xf32, #tpu.memory_space<any>>
    %c0_i32_55 = arith.constant 0 : i32
    %74 = tpu.memref_slice %arg7[%c0_i32_50, %c6_i32_51, %c0_i32_55] : memref<2x8x128xf32, #tpu.memory_space<vmem>> -> memref<1x1x128xf32, #tpu.memory_space<vmem>>
    %75 = tpu.memref_squeeze %74 : memref<1x1x128xf32, #tpu.memory_space<vmem>> -> memref<128xf32, #tpu.memory_space<vmem>>
    %76 = tpu.memref_slice %arg8[%c0_i32_52, %c6_i32_53] : memref<2x8x!tpu.dma_semaphore, #tpu.memory_space<semaphore_mem>> -> memref<1x1x!tpu.dma_semaphore, #tpu.memory_space<semaphore_mem>>
    %77 = tpu.memref_squeeze %76 : memref<1x1x!tpu.dma_semaphore, #tpu.memory_space<semaphore_mem>> -> memref<!tpu.dma_semaphore, #tpu.memory_space<semaphore_mem>>
    tpu.enqueue_dma source(%73 : memref<128xf32, #tpu.memory_space<any>>) target(%75 : memref<128xf32, #tpu.memory_space<vmem>>) target_semaphore(%77 : memref<!tpu.dma_semaphore, #tpu.memory_space<semaphore_mem>>)
    %c7_i32 = arith.constant 7 : i32
    %78 = arith.addi %0, %c7_i32 : i32
    %c8_i32_56 = arith.constant 8 : i32
    %79 = arith.muli %78, %c8_i32_56 : i32
    %c0_i32_57 = arith.constant 0 : i32
    %80 = arith.addi %79, %c0_i32_57 : i32
    %81 = arith.index_cast %80 : i32 to index
    %82 = memref.load %arg1[%81] : memref<64xi32, #tpu.memory_space<smem>>
    %c0_i32_58 = arith.constant 0 : i32
    %c7_i32_59 = arith.constant 7 : i32
    %c0_i32_60 = arith.constant 0 : i32
    %c7_i32_61 = arith.constant 7 : i32
    %c0_i32_62 = arith.constant 0 : i32
    %83 = tpu.memref_slice %arg4[%82, %c0_i32_62] : memref<64x128xf32, #tpu.memory_space<any>> -> memref<1x128xf32, #tpu.memory_space<any>>
    %84 = tpu.memref_squeeze %83 : memref<1x128xf32, #tpu.memory_space<any>> -> memref<128xf32, #tpu.memory_space<any>>
    %c0_i32_63 = arith.constant 0 : i32
    %85 = tpu.memref_slice %arg7[%c0_i32_58, %c7_i32_59, %c0_i32_63] : memref<2x8x128xf32, #tpu.memory_space<vmem>> -> memref<1x1x128xf32, #tpu.memory_space<vmem>>
    %86 = tpu.memref_squeeze %85 : memref<1x1x128xf32, #tpu.memory_space<vmem>> -> memref<128xf32, #tpu.memory_space<vmem>>
    %87 = tpu.memref_slice %arg8[%c0_i32_60, %c7_i32_61] : memref<2x8x!tpu.dma_semaphore, #tpu.memory_space<semaphore_mem>> -> memref<1x1x!tpu.dma_semaphore, #tpu.memory_space<semaphore_mem>>
    %88 = tpu.memref_squeeze %87 : memref<1x1x!tpu.dma_semaphore, #tpu.memory_space<semaphore_mem>> -> memref<!tpu.dma_semaphore, #tpu.memory_space<semaphore_mem>>
    tpu.enqueue_dma source(%84 : memref<128xf32, #tpu.memory_space<any>>) target(%86 : memref<128xf32, #tpu.memory_space<vmem>>) target_semaphore(%88 : memref<!tpu.dma_semaphore, #tpu.memory_space<semaphore_mem>>)
    %cst = arith.constant 0.000000e+00 : f32
    %89 = vector.broadcast %cst : f32 to vector<8x128xf32>
    %c0 = arith.constant 0 : index
    %c0_64 = arith.constant 0 : index
    %90 = vector.load %arg6[%c0, %c0_64] : memref<8x128xf32, #tpu.memory_space<vmem>>, vector<8x128xf32>
    tpu.vector_store %arg6[%c0, %c0_64], %89 {strides = array<i32>} : memref<8x128xf32, #tpu.memory_space<vmem>>, vector<8x128xf32>,
    %c0_i32_65 = arith.constant 0 : i32
    %c8_i32_66 = arith.constant 8 : i32
    %91 = arith.addi %c0_i32_65, %c8_i32_66 : i32
    %c1_i32_67 = arith.constant 1 : i32
    scf.for %arg9 = %c0_i32_65 to %91 step %c1_i32_67  : i32 {
      %c2_i32_78 = arith.constant 2 : i32
      %c0_i32_79 = arith.constant 0 : i32
      %106 = arith.cmpi eq, %c2_i32_78, %c0_i32_79 : i32
      %c1_i32_80 = arith.constant 1 : i32
      %107 = arith.select %106, %c1_i32_80, %c2_i32_78 : i32
      %108 = arith.remsi %arg9, %107 : i32
      %c0_i32_81 = arith.constant 0 : i32
      %109 = arith.cmpi ne, %108, %c0_i32_81 : i32
      %c0_i32_82 = arith.constant 0 : i32
      %110 = arith.cmpi slt, %108, %c0_i32_82 : i32
      %c0_i32_83 = arith.constant 0 : i32
      %111 = arith.cmpi slt, %107, %c0_i32_83 : i32
      %112 = arith.xori %110, %111 : i1
      %113 = arith.andi %112, %109 : i1
      %114 = arith.addi %108, %107 : i32
      %115 = arith.select %113, %114, %108 : i32
      %c0_i32_84 = arith.constant 0 : i32
      %c0_i32_85 = arith.constant 0 : i32
      %c0_i32_86 = arith.constant 0 : i32
      %c0_i32_87 = arith.constant 0 : i32
      %116 = tpu.memref_slice %arg4[%c0_i32_84, %c0_i32_87] : memref<64x128xf32, #tpu.memory_space<any>> -> memref<1x128xf32, #tpu.memory_space<any>>
      %117 = tpu.memref_squeeze %116 : memref<1x128xf32, #tpu.memory_space<any>> -> memref<128xf32, #tpu.memory_space<any>>
      %c0_i32_88 = arith.constant 0 : i32
      %118 = tpu.memref_slice %arg7[%115, %c0_i32_85, %c0_i32_88] : memref<2x8x128xf32, #tpu.memory_space<vmem>> -> memref<1x1x128xf32, #tpu.memory_space<vmem>>
      %119 = tpu.memref_squeeze %118 : memref<1x1x128xf32, #tpu.memory_space<vmem>> -> memref<128xf32, #tpu.memory_space<vmem>>
      %120 = tpu.memref_slice %arg8[%115, %c0_i32_86] : memref<2x8x!tpu.dma_semaphore, #tpu.memory_space<semaphore_mem>> -> memref<1x1x!tpu.dma_semaphore, #tpu.memory_space<semaphore_mem>>
      %121 = tpu.memref_squeeze %120 : memref<1x1x!tpu.dma_semaphore, #tpu.memory_space<semaphore_mem>> -> memref<!tpu.dma_semaphore, #tpu.memory_space<semaphore_mem>>
      tpu.wait_dma2 semaphore(%121 : memref<!tpu.dma_semaphore, #tpu.memory_space<semaphore_mem>>) src(%117 : memref<128xf32, #tpu.memory_space<any>>) dst(%119 : memref<128xf32, #tpu.memory_space<vmem>>)
      %c0_i32_89 = arith.constant 0 : i32
      %c1_i32_90 = arith.constant 1 : i32
      %c1_i32_91 = arith.constant 1 : i32
      %c0_i32_92 = arith.constant 0 : i32
      %122 = tpu.memref_slice %arg4[%c0_i32_89, %c0_i32_92] : memref<64x128xf32, #tpu.memory_space<any>> -> memref<1x128xf32, #tpu.memory_space<any>>
      %123 = tpu.memref_squeeze %122 : memref<1x128xf32, #tpu.memory_space<any>> -> memref<128xf32, #tpu.memory_space<any>>
      %c0_i32_93 = arith.constant 0 : i32
      %124 = tpu.memref_slice %arg7[%115, %c1_i32_90, %c0_i32_93] : memref<2x8x128xf32, #tpu.memory_space<vmem>> -> memref<1x1x128xf32, #tpu.memory_space<vmem>>
      %125 = tpu.memref_squeeze %124 : memref<1x1x128xf32, #tpu.memory_space<vmem>> -> memref<128xf32, #tpu.memory_space<vmem>>
      %126 = tpu.memref_slice %arg8[%115, %c1_i32_91] : memref<2x8x!tpu.dma_semaphore, #tpu.memory_space<semaphore_mem>> -> memref<1x1x!tpu.dma_semaphore, #tpu.memory_space<semaphore_mem>>
      %127 = tpu.memref_squeeze %126 : memref<1x1x!tpu.dma_semaphore, #tpu.memory_space<semaphore_mem>> -> memref<!tpu.dma_semaphore, #tpu.memory_space<semaphore_mem>>
      tpu.wait_dma2 semaphore(%127 : memref<!tpu.dma_semaphore, #tpu.memory_space<semaphore_mem>>) src(%123 : memref<128xf32, #tpu.memory_space<any>>) dst(%125 : memref<128xf32, #tpu.memory_space<vmem>>)
      %c0_i32_94 = arith.constant 0 : i32
      %c2_i32_95 = arith.constant 2 : i32
      %c2_i32_96 = arith.constant 2 : i32
      %c0_i32_97 = arith.constant 0 : i32
      %128 = tpu.memref_slice %arg4[%c0_i32_94, %c0_i32_97] : memref<64x128xf32, #tpu.memory_space<any>> -> memref<1x128xf32, #tpu.memory_space<any>>
      %129 = tpu.memref_squeeze %128 : memref<1x128xf32, #tpu.memory_space<any>> -> memref<128xf32, #tpu.memory_space<any>>
      %c0_i32_98 = arith.constant 0 : i32
      %130 = tpu.memref_slice %arg7[%115, %c2_i32_95, %c0_i32_98] : memref<2x8x128xf32, #tpu.memory_space<vmem>> -> memref<1x1x128xf32, #tpu.memory_space<vmem>>
      %131 = tpu.memref_squeeze %130 : memref<1x1x128xf32, #tpu.memory_space<vmem>> -> memref<128xf32, #tpu.memory_space<vmem>>
      %132 = tpu.memref_slice %arg8[%115, %c2_i32_96] : memref<2x8x!tpu.dma_semaphore, #tpu.memory_space<semaphore_mem>> -> memref<1x1x!tpu.dma_semaphore, #tpu.memory_space<semaphore_mem>>
      %133 = tpu.memref_squeeze %132 : memref<1x1x!tpu.dma_semaphore, #tpu.memory_space<semaphore_mem>> -> memref<!tpu.dma_semaphore, #tpu.memory_space<semaphore_mem>>
      tpu.wait_dma2 semaphore(%133 : memref<!tpu.dma_semaphore, #tpu.memory_space<semaphore_mem>>) src(%129 : memref<128xf32, #tpu.memory_space<any>>) dst(%131 : memref<128xf32, #tpu.memory_space<vmem>>)
      %c0_i32_99 = arith.constant 0 : i32
      %c3_i32_100 = arith.constant 3 : i32
      %c3_i32_101 = arith.constant 3 : i32
      %c0_i32_102 = arith.constant 0 : i32
      %134 = tpu.memref_slice %arg4[%c0_i32_99, %c0_i32_102] : memref<64x128xf32, #tpu.memory_space<any>> -> memref<1x128xf32, #tpu.memory_space<any>>
      %135 = tpu.memref_squeeze %134 : memref<1x128xf32, #tpu.memory_space<any>> -> memref<128xf32, #tpu.memory_space<any>>
      %c0_i32_103 = arith.constant 0 : i32
      %136 = tpu.memref_slice %arg7[%115, %c3_i32_100, %c0_i32_103] : memref<2x8x128xf32, #tpu.memory_space<vmem>> -> memref<1x1x128xf32, #tpu.memory_space<vmem>>
      %137 = tpu.memref_squeeze %136 : memref<1x1x128xf32, #tpu.memory_space<vmem>> -> memref<128xf32, #tpu.memory_space<vmem>>
      %138 = tpu.memref_slice %arg8[%115, %c3_i32_101] : memref<2x8x!tpu.dma_semaphore, #tpu.memory_space<semaphore_mem>> -> memref<1x1x!tpu.dma_semaphore, #tpu.memory_space<semaphore_mem>>
      %139 = tpu.memref_squeeze %138 : memref<1x1x!tpu.dma_semaphore, #tpu.memory_space<semaphore_mem>> -> memref<!tpu.dma_semaphore, #tpu.memory_space<semaphore_mem>>
      tpu.wait_dma2 semaphore(%139 : memref<!tpu.dma_semaphore, #tpu.memory_space<semaphore_mem>>) src(%135 : memref<128xf32, #tpu.memory_space<any>>) dst(%137 : memref<128xf32, #tpu.memory_space<vmem>>)
      %c0_i32_104 = arith.constant 0 : i32
      %c4_i32_105 = arith.constant 4 : i32
      %c4_i32_106 = arith.constant 4 : i32
      %c0_i32_107 = arith.constant 0 : i32
      %140 = tpu.memref_slice %arg4[%c0_i32_104, %c0_i32_107] : memref<64x128xf32, #tpu.memory_space<any>> -> memref<1x128xf32, #tpu.memory_space<any>>
      %141 = tpu.memref_squeeze %140 : memref<1x128xf32, #tpu.memory_space<any>> -> memref<128xf32, #tpu.memory_space<any>>
      %c0_i32_108 = arith.constant 0 : i32
      %142 = tpu.memref_slice %arg7[%115, %c4_i32_105, %c0_i32_108] : memref<2x8x128xf32, #tpu.memory_space<vmem>> -> memref<1x1x128xf32, #tpu.memory_space<vmem>>
      %143 = tpu.memref_squeeze %142 : memref<1x1x128xf32, #tpu.memory_space<vmem>> -> memref<128xf32, #tpu.memory_space<vmem>>
      %144 = tpu.memref_slice %arg8[%115, %c4_i32_106] : memref<2x8x!tpu.dma_semaphore, #tpu.memory_space<semaphore_mem>> -> memref<1x1x!tpu.dma_semaphore, #tpu.memory_space<semaphore_mem>>
      %145 = tpu.memref_squeeze %144 : memref<1x1x!tpu.dma_semaphore, #tpu.memory_space<semaphore_mem>> -> memref<!tpu.dma_semaphore, #tpu.memory_space<semaphore_mem>>
      tpu.wait_dma2 semaphore(%145 : memref<!tpu.dma_semaphore, #tpu.memory_space<semaphore_mem>>) src(%141 : memref<128xf32, #tpu.memory_space<any>>) dst(%143 : memref<128xf32, #tpu.memory_space<vmem>>)
      %c0_i32_109 = arith.constant 0 : i32
      %c5_i32_110 = arith.constant 5 : i32
      %c5_i32_111 = arith.constant 5 : i32
      %c0_i32_112 = arith.constant 0 : i32
      %146 = tpu.memref_slice %arg4[%c0_i32_109, %c0_i32_112] : memref<64x128xf32, #tpu.memory_space<any>> -> memref<1x128xf32, #tpu.memory_space<any>>
      %147 = tpu.memref_squeeze %146 : memref<1x128xf32, #tpu.memory_space<any>> -> memref<128xf32, #tpu.memory_space<any>>
      %c0_i32_113 = arith.constant 0 : i32
      %148 = tpu.memref_slice %arg7[%115, %c5_i32_110, %c0_i32_113] : memref<2x8x128xf32, #tpu.memory_space<vmem>> -> memref<1x1x128xf32, #tpu.memory_space<vmem>>
      %149 = tpu.memref_squeeze %148 : memref<1x1x128xf32, #tpu.memory_space<vmem>> -> memref<128xf32, #tpu.memory_space<vmem>>
      %150 = tpu.memref_slice %arg8[%115, %c5_i32_111] : memref<2x8x!tpu.dma_semaphore, #tpu.memory_space<semaphore_mem>> -> memref<1x1x!tpu.dma_semaphore, #tpu.memory_space<semaphore_mem>>
      %151 = tpu.memref_squeeze %150 : memref<1x1x!tpu.dma_semaphore, #tpu.memory_space<semaphore_mem>> -> memref<!tpu.dma_semaphore, #tpu.memory_space<semaphore_mem>>
      tpu.wait_dma2 semaphore(%151 : memref<!tpu.dma_semaphore, #tpu.memory_space<semaphore_mem>>) src(%147 : memref<128xf32, #tpu.memory_space<any>>) dst(%149 : memref<128xf32, #tpu.memory_space<vmem>>)
      %c0_i32_114 = arith.constant 0 : i32
      %c6_i32_115 = arith.constant 6 : i32
      %c6_i32_116 = arith.constant 6 : i32
      %c0_i32_117 = arith.constant 0 : i32
      %152 = tpu.memref_slice %arg4[%c0_i32_114, %c0_i32_117] : memref<64x128xf32, #tpu.memory_space<any>> -> memref<1x128xf32, #tpu.memory_space<any>>
      %153 = tpu.memref_squeeze %152 : memref<1x128xf32, #tpu.memory_space<any>> -> memref<128xf32, #tpu.memory_space<any>>
      %c0_i32_118 = arith.constant 0 : i32
      %154 = tpu.memref_slice %arg7[%115, %c6_i32_115, %c0_i32_118] : memref<2x8x128xf32, #tpu.memory_space<vmem>> -> memref<1x1x128xf32, #tpu.memory_space<vmem>>
      %155 = tpu.memref_squeeze %154 : memref<1x1x128xf32, #tpu.memory_space<vmem>> -> memref<128xf32, #tpu.memory_space<vmem>>
      %156 = tpu.memref_slice %arg8[%115, %c6_i32_116] : memref<2x8x!tpu.dma_semaphore, #tpu.memory_space<semaphore_mem>> -> memref<1x1x!tpu.dma_semaphore, #tpu.memory_space<semaphore_mem>>
      %157 = tpu.memref_squeeze %156 : memref<1x1x!tpu.dma_semaphore, #tpu.memory_space<semaphore_mem>> -> memref<!tpu.dma_semaphore, #tpu.memory_space<semaphore_mem>>
      tpu.wait_dma2 semaphore(%157 : memref<!tpu.dma_semaphore, #tpu.memory_space<semaphore_mem>>) src(%153 : memref<128xf32, #tpu.memory_space<any>>) dst(%155 : memref<128xf32, #tpu.memory_space<vmem>>)
      %c0_i32_119 = arith.constant 0 : i32
      %c7_i32_120 = arith.constant 7 : i32
      %c7_i32_121 = arith.constant 7 : i32
      %c0_i32_122 = arith.constant 0 : i32
      %158 = tpu.memref_slice %arg4[%c0_i32_119, %c0_i32_122] : memref<64x128xf32, #tpu.memory_space<any>> -> memref<1x128xf32, #tpu.memory_space<any>>
      %159 = tpu.memref_squeeze %158 : memref<1x128xf32, #tpu.memory_space<any>> -> memref<128xf32, #tpu.memory_space<any>>
      %c0_i32_123 = arith.constant 0 : i32
      %160 = tpu.memref_slice %arg7[%115, %c7_i32_120, %c0_i32_123] : memref<2x8x128xf32, #tpu.memory_space<vmem>> -> memref<1x1x128xf32, #tpu.memory_space<vmem>>
      %161 = tpu.memref_squeeze %160 : memref<1x1x128xf32, #tpu.memory_space<vmem>> -> memref<128xf32, #tpu.memory_space<vmem>>
      %162 = tpu.memref_slice %arg8[%115, %c7_i32_121] : memref<2x8x!tpu.dma_semaphore, #tpu.memory_space<semaphore_mem>> -> memref<1x1x!tpu.dma_semaphore, #tpu.memory_space<semaphore_mem>>
      %163 = tpu.memref_squeeze %162 : memref<1x1x!tpu.dma_semaphore, #tpu.memory_space<semaphore_mem>> -> memref<!tpu.dma_semaphore, #tpu.memory_space<semaphore_mem>>
      tpu.wait_dma2 semaphore(%163 : memref<!tpu.dma_semaphore, #tpu.memory_space<semaphore_mem>>) src(%159 : memref<128xf32, #tpu.memory_space<any>>) dst(%161 : memref<128xf32, #tpu.memory_space<vmem>>)
      %c1_i32_124 = arith.constant 1 : i32
      %164 = arith.addi %arg9, %c1_i32_124 : i32
      %c8_i32_125 = arith.constant 8 : i32
      %165 = arith.cmpi slt, %164, %c8_i32_125 : i32
      %166 = arith.extui %165 : i1 to i32
      %c0_i32_126 = arith.constant 0 : i32
      %167 = arith.cmpi ne, %166, %c0_i32_126 : i32
      scf.if %167 {
        %c1_i32_133 = arith.constant 1 : i32
        %174 = arith.addi %arg9, %c1_i32_133 : i32
        %c1_i32_134 = arith.constant 1 : i32
        %175 = arith.addi %arg9, %c1_i32_134 : i32
        %c2_i32_135 = arith.constant 2 : i32
        %c0_i32_136 = arith.constant 0 : i32
        %176 = arith.cmpi eq, %c2_i32_135, %c0_i32_136 : i32
        %c1_i32_137 = arith.constant 1 : i32
        %177 = arith.select %176, %c1_i32_137, %c2_i32_135 : i32
        %178 = arith.remsi %175, %177 : i32
        %c0_i32_138 = arith.constant 0 : i32
        %179 = arith.cmpi ne, %178, %c0_i32_138 : i32
        %c0_i32_139 = arith.constant 0 : i32
        %180 = arith.cmpi slt, %178, %c0_i32_139 : i32
        %c0_i32_140 = arith.constant 0 : i32
        %181 = arith.cmpi slt, %177, %c0_i32_140 : i32
        %182 = arith.xori %180, %181 : i1
        %183 = arith.andi %182, %179 : i1
        %184 = arith.addi %178, %177 : i32
        %185 = arith.select %183, %184, %178 : i32
        %c0_i32_141 = arith.constant 0 : i32
        %186 = arith.addi %0, %c0_i32_141 : i32
        %c8_i32_142 = arith.constant 8 : i32
        %187 = arith.muli %186, %c8_i32_142 : i32
        %188 = arith.addi %187, %174 : i32
        %189 = arith.index_cast %188 : i32 to index
        %190 = memref.load %arg1[%189] : memref<64xi32, #tpu.memory_space<smem>>
        %c0_i32_143 = arith.constant 0 : i32
        %c0_i32_144 = arith.constant 0 : i32
        %c0_i32_145 = arith.constant 0 : i32
        %191 = tpu.memref_slice %arg4[%190, %c0_i32_145] : memref<64x128xf32, #tpu.memory_space<any>> -> memref<1x128xf32, #tpu.memory_space<any>>
        %192 = tpu.memref_squeeze %191 : memref<1x128xf32, #tpu.memory_space<any>> -> memref<128xf32, #tpu.memory_space<any>>
        %c0_i32_146 = arith.constant 0 : i32
        %193 = tpu.memref_slice %arg7[%185, %c0_i32_143, %c0_i32_146] : memref<2x8x128xf32, #tpu.memory_space<vmem>> -> memref<1x1x128xf32, #tpu.memory_space<vmem>>
        %194 = tpu.memref_squeeze %193 : memref<1x1x128xf32, #tpu.memory_space<vmem>> -> memref<128xf32, #tpu.memory_space<vmem>>
        %195 = tpu.memref_slice %arg8[%185, %c0_i32_144] : memref<2x8x!tpu.dma_semaphore, #tpu.memory_space<semaphore_mem>> -> memref<1x1x!tpu.dma_semaphore, #tpu.memory_space<semaphore_mem>>
        %196 = tpu.memref_squeeze %195 : memref<1x1x!tpu.dma_semaphore, #tpu.memory_space<semaphore_mem>> -> memref<!tpu.dma_semaphore, #tpu.memory_space<semaphore_mem>>
        tpu.enqueue_dma source(%192 : memref<128xf32, #tpu.memory_space<any>>) target(%194 : memref<128xf32, #tpu.memory_space<vmem>>) target_semaphore(%196 : memref<!tpu.dma_semaphore, #tpu.memory_space<semaphore_mem>>)
        %c1_i32_147 = arith.constant 1 : i32
        %197 = arith.addi %0, %c1_i32_147 : i32
        %c8_i32_148 = arith.constant 8 : i32
        %198 = arith.muli %197, %c8_i32_148 : i32
        %199 = arith.addi %198, %174 : i32
        %200 = arith.index_cast %199 : i32 to index
        %201 = memref.load %arg1[%200] : memref<64xi32, #tpu.memory_space<smem>>
        %c1_i32_149 = arith.constant 1 : i32
        %c1_i32_150 = arith.constant 1 : i32
        %c0_i32_151 = arith.constant 0 : i32
        %202 = tpu.memref_slice %arg4[%201, %c0_i32_151] : memref<64x128xf32, #tpu.memory_space<any>> -> memref<1x128xf32, #tpu.memory_space<any>>
        %203 = tpu.memref_squeeze %202 : memref<1x128xf32, #tpu.memory_space<any>> -> memref<128xf32, #tpu.memory_space<any>>
        %c0_i32_152 = arith.constant 0 : i32
        %204 = tpu.memref_slice %arg7[%185, %c1_i32_149, %c0_i32_152] : memref<2x8x128xf32, #tpu.memory_space<vmem>> -> memref<1x1x128xf32, #tpu.memory_space<vmem>>
        %205 = tpu.memref_squeeze %204 : memref<1x1x128xf32, #tpu.memory_space<vmem>> -> memref<128xf32, #tpu.memory_space<vmem>>
        %206 = tpu.memref_slice %arg8[%185, %c1_i32_150] : memref<2x8x!tpu.dma_semaphore, #tpu.memory_space<semaphore_mem>> -> memref<1x1x!tpu.dma_semaphore, #tpu.memory_space<semaphore_mem>>
        %207 = tpu.memref_squeeze %206 : memref<1x1x!tpu.dma_semaphore, #tpu.memory_space<semaphore_mem>> -> memref<!tpu.dma_semaphore, #tpu.memory_space<semaphore_mem>>
        tpu.enqueue_dma source(%203 : memref<128xf32, #tpu.memory_space<any>>) target(%205 : memref<128xf32, #tpu.memory_space<vmem>>) target_semaphore(%207 : memref<!tpu.dma_semaphore, #tpu.memory_space<semaphore_mem>>)
        %c2_i32_153 = arith.constant 2 : i32
        %208 = arith.addi %0, %c2_i32_153 : i32
        %c8_i32_154 = arith.constant 8 : i32
        %209 = arith.muli %208, %c8_i32_154 : i32
        %210 = arith.addi %209, %174 : i32
        %211 = arith.index_cast %210 : i32 to index
        %212 = memref.load %arg1[%211] : memref<64xi32, #tpu.memory_space<smem>>
        %c2_i32_155 = arith.constant 2 : i32
        %c2_i32_156 = arith.constant 2 : i32
        %c0_i32_157 = arith.constant 0 : i32
        %213 = tpu.memref_slice %arg4[%212, %c0_i32_157] : memref<64x128xf32, #tpu.memory_space<any>> -> memref<1x128xf32, #tpu.memory_space<any>>
        %214 = tpu.memref_squeeze %213 : memref<1x128xf32, #tpu.memory_space<any>> -> memref<128xf32, #tpu.memory_space<any>>
        %c0_i32_158 = arith.constant 0 : i32
        %215 = tpu.memref_slice %arg7[%185, %c2_i32_155, %c0_i32_158] : memref<2x8x128xf32, #tpu.memory_space<vmem>> -> memref<1x1x128xf32, #tpu.memory_space<vmem>>
        %216 = tpu.memref_squeeze %215 : memref<1x1x128xf32, #tpu.memory_space<vmem>> -> memref<128xf32, #tpu.memory_space<vmem>>
        %217 = tpu.memref_slice %arg8[%185, %c2_i32_156] : memref<2x8x!tpu.dma_semaphore, #tpu.memory_space<semaphore_mem>> -> memref<1x1x!tpu.dma_semaphore, #tpu.memory_space<semaphore_mem>>
        %218 = tpu.memref_squeeze %217 : memref<1x1x!tpu.dma_semaphore, #tpu.memory_space<semaphore_mem>> -> memref<!tpu.dma_semaphore, #tpu.memory_space<semaphore_mem>>
        tpu.enqueue_dma source(%214 : memref<128xf32, #tpu.memory_space<any>>) target(%216 : memref<128xf32, #tpu.memory_space<vmem>>) target_semaphore(%218 : memref<!tpu.dma_semaphore, #tpu.memory_space<semaphore_mem>>)
        %c3_i32_159 = arith.constant 3 : i32
        %219 = arith.addi %0, %c3_i32_159 : i32
        %c8_i32_160 = arith.constant 8 : i32
        %220 = arith.muli %219, %c8_i32_160 : i32
        %221 = arith.addi %220, %174 : i32
        %222 = arith.index_cast %221 : i32 to index
        %223 = memref.load %arg1[%222] : memref<64xi32, #tpu.memory_space<smem>>
        %c3_i32_161 = arith.constant 3 : i32
        %c3_i32_162 = arith.constant 3 : i32
        %c0_i32_163 = arith.constant 0 : i32
        %224 = tpu.memref_slice %arg4[%223, %c0_i32_163] : memref<64x128xf32, #tpu.memory_space<any>> -> memref<1x128xf32, #tpu.memory_space<any>>
        %225 = tpu.memref_squeeze %224 : memref<1x128xf32, #tpu.memory_space<any>> -> memref<128xf32, #tpu.memory_space<any>>
        %c0_i32_164 = arith.constant 0 : i32
        %226 = tpu.memref_slice %arg7[%185, %c3_i32_161, %c0_i32_164] : memref<2x8x128xf32, #tpu.memory_space<vmem>> -> memref<1x1x128xf32, #tpu.memory_space<vmem>>
        %227 = tpu.memref_squeeze %226 : memref<1x1x128xf32, #tpu.memory_space<vmem>> -> memref<128xf32, #tpu.memory_space<vmem>>
        %228 = tpu.memref_slice %arg8[%185, %c3_i32_162] : memref<2x8x!tpu.dma_semaphore, #tpu.memory_space<semaphore_mem>> -> memref<1x1x!tpu.dma_semaphore, #tpu.memory_space<semaphore_mem>>
        %229 = tpu.memref_squeeze %228 : memref<1x1x!tpu.dma_semaphore, #tpu.memory_space<semaphore_mem>> -> memref<!tpu.dma_semaphore, #tpu.memory_space<semaphore_mem>>
        tpu.enqueue_dma source(%225 : memref<128xf32, #tpu.memory_space<any>>) target(%227 : memref<128xf32, #tpu.memory_space<vmem>>) target_semaphore(%229 : memref<!tpu.dma_semaphore, #tpu.memory_space<semaphore_mem>>)
        %c4_i32_165 = arith.constant 4 : i32
        %230 = arith.addi %0, %c4_i32_165 : i32
        %c8_i32_166 = arith.constant 8 : i32
        %231 = arith.muli %230, %c8_i32_166 : i32
        %232 = arith.addi %231, %174 : i32
        %233 = arith.index_cast %232 : i32 to index
        %234 = memref.load %arg1[%233] : memref<64xi32, #tpu.memory_space<smem>>
        %c4_i32_167 = arith.constant 4 : i32
        %c4_i32_168 = arith.constant 4 : i32
        %c0_i32_169 = arith.constant 0 : i32
        %235 = tpu.memref_slice %arg4[%234, %c0_i32_169] : memref<64x128xf32, #tpu.memory_space<any>> -> memref<1x128xf32, #tpu.memory_space<any>>
        %236 = tpu.memref_squeeze %235 : memref<1x128xf32, #tpu.memory_space<any>> -> memref<128xf32, #tpu.memory_space<any>>
        %c0_i32_170 = arith.constant 0 : i32
        %237 = tpu.memref_slice %arg7[%185, %c4_i32_167, %c0_i32_170] : memref<2x8x128xf32, #tpu.memory_space<vmem>> -> memref<1x1x128xf32, #tpu.memory_space<vmem>>
        %238 = tpu.memref_squeeze %237 : memref<1x1x128xf32, #tpu.memory_space<vmem>> -> memref<128xf32, #tpu.memory_space<vmem>>
        %239 = tpu.memref_slice %arg8[%185, %c4_i32_168] : memref<2x8x!tpu.dma_semaphore, #tpu.memory_space<semaphore_mem>> -> memref<1x1x!tpu.dma_semaphore, #tpu.memory_space<semaphore_mem>>
        %240 = tpu.memref_squeeze %239 : memref<1x1x!tpu.dma_semaphore, #tpu.memory_space<semaphore_mem>> -> memref<!tpu.dma_semaphore, #tpu.memory_space<semaphore_mem>>
        tpu.enqueue_dma source(%236 : memref<128xf32, #tpu.memory_space<any>>) target(%238 : memref<128xf32, #tpu.memory_space<vmem>>) target_semaphore(%240 : memref<!tpu.dma_semaphore, #tpu.memory_space<semaphore_mem>>)
        %c5_i32_171 = arith.constant 5 : i32
        %241 = arith.addi %0, %c5_i32_171 : i32
        %c8_i32_172 = arith.constant 8 : i32
        %242 = arith.muli %241, %c8_i32_172 : i32
        %243 = arith.addi %242, %174 : i32
        %244 = arith.index_cast %243 : i32 to index
        %245 = memref.load %arg1[%244] : memref<64xi32, #tpu.memory_space<smem>>
        %c5_i32_173 = arith.constant 5 : i32
        %c5_i32_174 = arith.constant 5 : i32
        %c0_i32_175 = arith.constant 0 : i32
        %246 = tpu.memref_slice %arg4[%245, %c0_i32_175] : memref<64x128xf32, #tpu.memory_space<any>> -> memref<1x128xf32, #tpu.memory_space<any>>
        %247 = tpu.memref_squeeze %246 : memref<1x128xf32, #tpu.memory_space<any>> -> memref<128xf32, #tpu.memory_space<any>>
        %c0_i32_176 = arith.constant 0 : i32
        %248 = tpu.memref_slice %arg7[%185, %c5_i32_173, %c0_i32_176] : memref<2x8x128xf32, #tpu.memory_space<vmem>> -> memref<1x1x128xf32, #tpu.memory_space<vmem>>
        %249 = tpu.memref_squeeze %248 : memref<1x1x128xf32, #tpu.memory_space<vmem>> -> memref<128xf32, #tpu.memory_space<vmem>>
        %250 = tpu.memref_slice %arg8[%185, %c5_i32_174] : memref<2x8x!tpu.dma_semaphore, #tpu.memory_space<semaphore_mem>> -> memref<1x1x!tpu.dma_semaphore, #tpu.memory_space<semaphore_mem>>
        %251 = tpu.memref_squeeze %250 : memref<1x1x!tpu.dma_semaphore, #tpu.memory_space<semaphore_mem>> -> memref<!tpu.dma_semaphore, #tpu.memory_space<semaphore_mem>>
        tpu.enqueue_dma source(%247 : memref<128xf32, #tpu.memory_space<any>>) target(%249 : memref<128xf32, #tpu.memory_space<vmem>>) target_semaphore(%251 : memref<!tpu.dma_semaphore, #tpu.memory_space<semaphore_mem>>)
        %c6_i32_177 = arith.constant 6 : i32
        %252 = arith.addi %0, %c6_i32_177 : i32
        %c8_i32_178 = arith.constant 8 : i32
        %253 = arith.muli %252, %c8_i32_178 : i32
        %254 = arith.addi %253, %174 : i32
        %255 = arith.index_cast %254 : i32 to index
        %256 = memref.load %arg1[%255] : memref<64xi32, #tpu.memory_space<smem>>
        %c6_i32_179 = arith.constant 6 : i32
        %c6_i32_180 = arith.constant 6 : i32
        %c0_i32_181 = arith.constant 0 : i32
        %257 = tpu.memref_slice %arg4[%256, %c0_i32_181] : memref<64x128xf32, #tpu.memory_space<any>> -> memref<1x128xf32, #tpu.memory_space<any>>
        %258 = tpu.memref_squeeze %257 : memref<1x128xf32, #tpu.memory_space<any>> -> memref<128xf32, #tpu.memory_space<any>>
        %c0_i32_182 = arith.constant 0 : i32
        %259 = tpu.memref_slice %arg7[%185, %c6_i32_179, %c0_i32_182] : memref<2x8x128xf32, #tpu.memory_space<vmem>> -> memref<1x1x128xf32, #tpu.memory_space<vmem>>
        %260 = tpu.memref_squeeze %259 : memref<1x1x128xf32, #tpu.memory_space<vmem>> -> memref<128xf32, #tpu.memory_space<vmem>>
        %261 = tpu.memref_slice %arg8[%185, %c6_i32_180] : memref<2x8x!tpu.dma_semaphore, #tpu.memory_space<semaphore_mem>> -> memref<1x1x!tpu.dma_semaphore, #tpu.memory_space<semaphore_mem>>
        %262 = tpu.memref_squeeze %261 : memref<1x1x!tpu.dma_semaphore, #tpu.memory_space<semaphore_mem>> -> memref<!tpu.dma_semaphore, #tpu.memory_space<semaphore_mem>>
        tpu.enqueue_dma source(%258 : memref<128xf32, #tpu.memory_space<any>>) target(%260 : memref<128xf32, #tpu.memory_space<vmem>>) target_semaphore(%262 : memref<!tpu.dma_semaphore, #tpu.memory_space<semaphore_mem>>)
        %c7_i32_183 = arith.constant 7 : i32
        %263 = arith.addi %0, %c7_i32_183 : i32
        %c8_i32_184 = arith.constant 8 : i32
        %264 = arith.muli %263, %c8_i32_184 : i32
        %265 = arith.addi %264, %174 : i32
        %266 = arith.index_cast %265 : i32 to index
        %267 = memref.load %arg1[%266] : memref<64xi32, #tpu.memory_space<smem>>
        %c7_i32_185 = arith.constant 7 : i32
        %c7_i32_186 = arith.constant 7 : i32
        %c0_i32_187 = arith.constant 0 : i32
        %268 = tpu.memref_slice %arg4[%267, %c0_i32_187] : memref<64x128xf32, #tpu.memory_space<any>> -> memref<1x128xf32, #tpu.memory_space<any>>
        %269 = tpu.memref_squeeze %268 : memref<1x128xf32, #tpu.memory_space<any>> -> memref<128xf32, #tpu.memory_space<any>>
        %c0_i32_188 = arith.constant 0 : i32
        %270 = tpu.memref_slice %arg7[%185, %c7_i32_185, %c0_i32_188] : memref<2x8x128xf32, #tpu.memory_space<vmem>> -> memref<1x1x128xf32, #tpu.memory_space<vmem>>
        %271 = tpu.memref_squeeze %270 : memref<1x1x128xf32, #tpu.memory_space<vmem>> -> memref<128xf32, #tpu.memory_space<vmem>>
        %272 = tpu.memref_slice %arg8[%185, %c7_i32_186] : memref<2x8x!tpu.dma_semaphore, #tpu.memory_space<semaphore_mem>> -> memref<1x1x!tpu.dma_semaphore, #tpu.memory_space<semaphore_mem>>
        %273 = tpu.memref_squeeze %272 : memref<1x1x!tpu.dma_semaphore, #tpu.memory_space<semaphore_mem>> -> memref<!tpu.dma_semaphore, #tpu.memory_space<semaphore_mem>>
        tpu.enqueue_dma source(%269 : memref<128xf32, #tpu.memory_space<any>>) target(%271 : memref<128xf32, #tpu.memory_space<vmem>>) target_semaphore(%273 : memref<!tpu.dma_semaphore, #tpu.memory_space<semaphore_mem>>)
      } else {
      }
      %c0_127 = arith.constant 0 : index
      %c0_128 = arith.constant 0 : index
      %168 = vector.load %arg6[%c0_127, %c0_128] : memref<8x128xf32, #tpu.memory_space<vmem>>, vector<8x128xf32>
      %169 = arith.index_cast %115 : i32 to index
      %c0_129 = arith.constant 0 : index
      %c0_130 = arith.constant 0 : index
      %170 = vector.load %arg7[%169, %c0_129, %c0_130] : memref<2x8x128xf32, #tpu.memory_space<vmem>>, vector<1x8x128xf32>
      %171 = vector.shape_cast %170 : vector<1x8x128xf32> to vector<8x128xf32>
      %172 = arith.addf %168, %171 : vector<8x128xf32>
      %c0_131 = arith.constant 0 : index
      %c0_132 = arith.constant 0 : index
      %173 = vector.load %arg6[%c0_131, %c0_132] : memref<8x128xf32, #tpu.memory_space<vmem>>, vector<8x128xf32>
      tpu.vector_store %arg6[%c0_131, %c0_132], %172 {strides = array<i32>} : memref<8x128xf32, #tpu.memory_space<vmem>>, vector<8x128xf32>,
    }
    %c8_i32_68 = arith.constant 8 : i32
    %c0_69 = arith.constant 0 : index
    %c0_70 = arith.constant 0 : index
    %92 = vector.load %arg6[%c0_69, %c0_70] : memref<8x128xf32, #tpu.memory_space<vmem>>, vector<8x128xf32>
    %cst_71 = arith.constant 1.250000e-01 : f32
    %93 = vector.broadcast %cst_71 : f32 to vector<8x128xf32>
    %94 = arith.mulf %92, %93 : vector<8x128xf32>
    %c0_72 = arith.constant 0 : index
    %c0_73 = arith.constant 0 : index
    %95 = vector.load %arg2[%c0_72, %c0_73] : memref<1x128xf32, #tpu.memory_space<vmem>>, vector<1x128xf32>
    %96 = vector.broadcast %95 : vector<1x128xf32> to vector<8x128xf32>
    %97 = arith.mulf %94, %96 : vector<8x128xf32>
    %cst_74 = arith.constant dense<0.000000e+00> : vector<8xf32>
    %98 = vector.multi_reduction <add>, %97, %cst_74 [1] : vector<8x128xf32> to vector<8xf32>
    %99 = vector.shape_cast %98 : vector<8xf32> to vector<8x1xf32>
    %c0_75 = arith.constant 0 : index
    %100 = memref.load %arg3[%c0_75] : memref<1xf32, #tpu.memory_space<smem>>
    %101 = vector.broadcast %100 : f32 to vector<8x1xf32>
    %102 = arith.addf %99, %101 : vector<8x1xf32>
    %103 = vector.shape_cast %102 : vector<8x1xf32> to vector<8x1xf32>
    %104 = vector.broadcast %103 : vector<8x1xf32> to vector<8x128xf32>
    %c0_76 = arith.constant 0 : index
    %c0_77 = arith.constant 0 : index
    %105 = vector.load %arg5[%c0_76, %c0_77] : memref<8x128xf32, #tpu.memory_space<vmem>>, vector<8x128xf32>
    tpu.vector_store %arg5[%c0_76, %c0_77], %104 {strides = array<i32>} : memref<8x128xf32, #tpu.memory_space<vmem>>, vector<8x128xf32>,
    return
  }
  func.func @transform_0(%arg0: i32, %arg1: memref<64xi32, #tpu.memory_space<smem>>) -> (i32, i32) {
    %c0_i32 = arith.constant 0 : i32
    %c0_i32_0 = arith.constant 0 : i32
    %c0_i32_1 = arith.constant 0 : i32
    return %c0_i32, %c0_i32_0 : i32, i32
  }
  func.func @transform_1(%arg0: i32, %arg1: memref<64xi32, #tpu.memory_space<smem>>) -> i32 {
    %c0_i32 = arith.constant 0 : i32
    %c0_i32_0 = arith.constant 0 : i32
    return %c0_i32 : i32
  }
  func.func @transform_3(%arg0: i32, %arg1: memref<64xi32, #tpu.memory_space<smem>>) -> (i32, i32) {
    %c0_i32 = arith.constant 0 : i32
    %c0_i32_0 = arith.constant 0 : i32
    return %arg0, %c0_i32 : i32, i32
  }
}

</mosaic_0001>

<llo_original>
// kernel: tpu_custom_call.1
$region0: #{tpu_custom_call.1}
  #allocation0 [shape = 'u32[]', space=smem, size = 0x4, offset = 0x4, fixed_abs, tag = 'smem constant byte address 0x4 - core index']
  #allocation1 [shape = 'u32[72,128]{1,0:T(1,128)}', space=vmem, size = 0x9000, scoped, tag = 'internal scratch']
  #allocation2 [shape = 'f32[8,128]{1,0:T(8,128)}', space=vmem, size = 0x1000, scoped, tag = 'scratch operand']
  #allocation3 [shape = 'f32[2,8,128]{2,1,0:T(8,128)}', space=vmem, size = 0x2000, scoped, tag = 'scratch operand']
  #allocation4 [shape = 's32[16]{0}', space=sflag, size = 0x40, scoped, tag = 'scratch operand']
  #allocation5 [shape = 's32[1]{0}', space=sflag, size = 0x4, scoped, tag = 'scoped memory for tpu_custom_call.1']
  #allocation6 [shape = 'u8[512]{0}', space=smem, size = 0x200, scoped, tag = 'prefetched SMEM operand 0']
  #allocation7 [shape = 'f32[1]{0:T(128)S(6)}', space=smem, size = 0x200, scoped, tag = 'scoped memory for tpu_custom_call.1']
  #allocation10 [shape = 's32[]', space=sflag, size = 0x4, offset = 0, fixed_abs, tag = 'sflag constant byte address 0x0 - dummy sync flag']
  #allocation11 [shape = 's32[]', space=sflag, size = 0x4, offset = 0, fixed_abs, tag = 'sflag constant byte address 0x0 - dummy sync flag']
  #allocation12 [shape = 'u32[]', space=smem, size = 0x4, offset = 0x44, fixed_abs, tag = 'smem constant byte address 0x44 - assertion arg 0']
  #allocation13 [shape = 'u32[]', space=smem, size = 0x4, offset = 0x48, fixed_abs, tag = 'smem constant byte address 0x48 - assertion arg 1']
  #allocation14 [shape = 's32[]', space=sflag, size = 0x4, offset = 0, fixed_abs, tag = 'sflag constant byte address 0x0 - dummy sync flag']
  #allocation15 [shape = 's32[]', space=sflag, size = 0x4, offset = 0, fixed_abs, tag = 'sflag constant byte address 0x0 - dummy sync flag']
  #allocation16 [shape = 's32[]', space=sflag, size = 0x4, offset = 0, fixed_abs, tag = 'sflag constant byte address 0x0 - dummy sync flag']
  #allocation17 [shape = 's32[]', space=sflag, size = 0x4, offset = 0, fixed_abs, tag = 'sflag constant byte address 0x0 - dummy sync flag']
  #allocation18 [shape = 's32[]', space=sflag, size = 0x4, offset = 0, fixed_abs, tag = 'sflag constant byte address 0x0 - dummy sync flag']
  #allocation19 [shape = 's32[]', space=sflag, size = 0x4, offset = 0, fixed_abs, tag = 'sflag constant byte address 0x0 - dummy sync flag']
  #allocation20 [shape = 's32[]', space=sflag, size = 0x4, offset = 0, fixed_abs, tag = 'sflag constant byte address 0x0 - dummy sync flag']
  #allocation21 [shape = 's32[]', space=sflag, size = 0x4, offset = 0, fixed_abs, tag = 'sflag constant byte address 0x0 - dummy sync flag']
  #allocation22 [shape = 's32[]', space=sflag, size = 0x4, offset = 0, fixed_abs, tag = 'sflag constant byte address 0x0 - dummy sync flag']
  #allocation23 [shape = 's32[]', space=sflag, size = 0x4, offset = 0, fixed_abs, tag = 'sflag constant byte address 0x0 - dummy sync flag']
  #allocation24 [shape = 's32[]', space=sflag, size = 0x4, offset = 0, fixed_abs, tag = 'sflag constant byte address 0x0 - dummy sync flag']
  #allocation25 [shape = 's32[]', space=sflag, size = 0x4, offset = 0, fixed_abs, tag = 'sflag constant byte address 0x0 - dummy sync flag']
  #allocation26 [shape = 's32[]', space=sflag, size = 0x4, offset = 0, fixed_abs, tag = 'sflag constant byte address 0x0 - dummy sync flag']
  #allocation27 [shape = 's32[]', space=sflag, size = 0x4, offset = 0, fixed_abs, tag = 'sflag constant byte address 0x0 - dummy sync flag']
  #allocation28 [shape = 's32[]', space=sflag, size = 0x4, offset = 0, fixed_abs, tag = 'sflag constant byte address 0x0 - dummy sync flag']
  #allocation29 [shape = 's32[]', space=sflag, size = 0x4, offset = 0, fixed_abs, tag = 'sflag constant byte address 0x0 - dummy sync flag']
  #allocation30 [shape = 's32[]', space=sflag, size = 0x4, offset = 0, fixed_abs, tag = 'sflag constant byte address 0x0 - dummy sync flag']
  #allocation31 [shape = 's32[]', space=sflag, size = 0x4, offset = 0, fixed_abs, tag = 'sflag constant byte address 0x0 - dummy sync flag']
  #allocation32 [shape = 's32[]', space=sflag, size = 0x4, offset = 0, fixed_abs, tag = 'sflag constant byte address 0x0 - dummy sync flag']
  #allocation33 [shape = 's32[]', space=sflag, size = 0x4, offset = 0, fixed_abs, tag = 'sflag constant byte address 0x0 - dummy sync flag']
  #allocation34 [shape = 's32[]', space=sflag, size = 0x4, offset = 0, fixed_abs, tag = 'sflag constant byte address 0x0 - dummy sync flag']
  #allocation35 [shape = 's32[]', space=sflag, size = 0x4, offset = 0, fixed_abs, tag = 'sflag constant byte address 0x0 - dummy sync flag']
  #allocation36 [shape = 's32[]', space=sflag, size = 0x4, offset = 0, fixed_abs, tag = 'sflag constant byte address 0x0 - dummy sync flag']
  #allocation37 [shape = 's32[]', space=sflag, size = 0x4, offset = 0, fixed_abs, tag = 'sflag constant byte address 0x0 - dummy sync flag']
  #allocation38 [shape = 's32[]', space=sflag, size = 0x4, offset = 0, fixed_abs, tag = 'sflag constant byte address 0x0 - dummy sync flag']
  #allocation39 [shape = 's32[]', space=sflag, size = 0x4, offset = 0, fixed_abs, tag = 'sflag constant byte address 0x0 - dummy sync flag']
  #allocation40 [shape = 's32[]', space=sflag, size = 0x4, offset = 0, fixed_abs, tag = 'sflag constant byte address 0x0 - dummy sync flag']
  #allocation41 [shape = 's32[]', space=sflag, size = 0x4, offset = 0, fixed_abs, tag = 'sflag constant byte address 0x0 - dummy sync flag']
  #allocation42 [shape = 's32[]', space=sflag, size = 0x4, offset = 0, fixed_abs, tag = 'sflag constant byte address 0x0 - dummy sync flag']
  #allocation43 [shape = 's32[]', space=sflag, size = 0x4, offset = 0, fixed_abs, tag = 'sflag constant byte address 0x0 - dummy sync flag']
  %s0 = inlined_call_operand.vmem [shape: s32[64], index: 0, kind: input, shape index: {}]
  %s1 = inlined_call_operand.vmem [shape: f32[1,128], index: 1, kind: input, shape index: {}]
  %s2 = inlined_call_operand.<no memory space> [shape: f32[1], index: 2, kind: input, shape index: {}]
  %s3 = inlined_call_operand.hbm [shape: f32[64,128], index: 3, kind: input, shape index: {}]
  %s4 = inlined_call_operand.hbm [shape: f32[8,128], index: 4, kind: output, shape index: {}]
  %s5 = sld [smem:[#allocation0]]
  $region93: #{tpu_custom_call.1} parent=0
    _
  %s7 = ssub.s32 1, %s5
  %s8 = scalar_select 0, %s7, %s5
  %s10 = sshll.u32 %s0, 4
  %s11 = int_to_ptr.vmem [resolvable:$true] %s10
  %13 = dma.vmem_to_smem %s11, 16, [#allocation6], [#allocation5]
  %14 = sst [smem:[#allocation7]] %s2
  %16 = dma.done [#allocation5], 16
  %17 = sfence
  $region1: #{tpu_custom_call.1} parent=0
    #allocation8 [shape = 'u8[4096]{0}', space=vmem, size = 0x1000, scoped, tag = 'output window, operand 0, single buffered']
    #allocation9 [shape = 's32[1]{0}', space=sflag, size = 0x4, scoped, tag = 'scoped memory for tpu_custom_call.1']
    %18 = vsyncpa [#allocation9], 0
    // Predicated region
    $region2: #{tpu_custom_call.1} parent=1 // pred_check
      _
    $region3: #{tpu_custom_call.1} parent=1 // pred_check_branch
      %20 = sbr.rel (0) target = $region5
    $region4: #{tpu_custom_call.1} parent=1 // pred_region
      _
    $region5: #{tpu_custom_call.1} parent=1 // pred_fallthru
      _
    // Predicated region
    $region6: #{tpu_custom_call.1} parent=1 // pred_check
      _
    $region7: #{tpu_custom_call.1} parent=1 // pred_check_branch
      %22 = sbr.rel (0) target = $region9
    $region8: #{tpu_custom_call.1} parent=1 // pred_region
      _
    $region9: #{tpu_custom_call.1} parent=1 // pred_fallthru
      _
    %s23 = smul.u32 0, 8
    %s24 = smul.u32 0, 64
    %s25 = sld [smem:[#allocation6 + %s24]]
    %s26 = scalar_lea.hbm %s3, %s25
    // Predicated region
    $region10: #{tpu_custom_call.1} parent=1 // pred_check
      _
    $region11: #{tpu_custom_call.1} parent=1 // pred_check_branch
      %28 = sbr.rel target = $region13
    $region12: #{tpu_custom_call.1} parent=1 // pred_region
      %29 = sst [smem:[#allocation12]] [#allocation11]
      %30 = sst [smem:[#allocation13]] [#allocation10]
    $region13: #{tpu_custom_call.1} parent=1 // pred_fallthru
      _
    %32 = shalt.err (0)
    %s34 = sshll.u32 %s26, 4
    %s35 = int_to_ptr.hbm [resolvable:$true] %s34
    %s36 = sshll.u32 [#allocation3], 4
    %s37 = int_to_ptr.vmem [resolvable:$true] %s36
    %39 = dma.hbm_to_vmem [thread:$0]  %s35, 16, %s37, [#allocation4]
    %s40 = sadd.s32 %s23, 1
    %s41 = smul.u32 %s40, 8
    %s42 = sld [smem:[#allocation6 + %s41]]
    %s43 = scalar_lea.hbm %s3, %s42
    %s44 = scalar_lea.vmem [#allocation3], 1
    %s45 = scalar_lea.sflag [#allocation4], 1
    // Predicated region
    $region14: #{tpu_custom_call.1} parent=1 // pred_check
      _
    $region15: #{tpu_custom_call.1} parent=1 // pred_check_branch
      %47 = sbr.rel target = $region17
    $region16: #{tpu_custom_call.1} parent=1 // pred_region
      %48 = sst [smem:[#allocation12]] [#allocation15]
      %49 = sst [smem:[#allocation13]] [#allocation14]
    $region17: #{tpu_custom_call.1} parent=1 // pred_fallthru
      _
    %51 = shalt.err (0)
    %s53 = sshll.u32 %s43, 4
    %s54 = int_to_ptr.hbm [resolvable:$true] %s53
    %s55 = sshll.u32 %s44, 4
    %s56 = int_to_ptr.vmem [resolvable:$true] %s55
    %58 = dma.hbm_to_vmem [thread:$0]  %s54, 16, %s56, %s45
    %s59 = sadd.s32 %s23, 2
    %s60 = smul.u32 %s59, 8
    %s61 = sld [smem:[#allocation6 + %s60]]
    %s62 = scalar_lea.hbm %s3, %s61
    %s63 = scalar_lea.vmem [#allocation3], 2
    %s64 = scalar_lea.sflag [#allocation4], 2
    // Predicated region
    $region18: #{tpu_custom_call.1} parent=1 // pred_check
      _
    $region19: #{tpu_custom_call.1} parent=1 // pred_check_branch
      %66 = sbr.rel target = $region21
    $region20: #{tpu_custom_call.1} parent=1 // pred_region
      %67 = sst [smem:[#allocation12]] [#allocation17]
      %68 = sst [smem:[#allocation13]] [#allocation16]
    $region21: #{tpu_custom_call.1} parent=1 // pred_fallthru
      _
    %70 = shalt.err (0)
    %s72 = sshll.u32 %s62, 4
    %s73 = int_to_ptr.hbm [resolvable:$true] %s72
    %s74 = sshll.u32 %s63, 4
    %s75 = int_to_ptr.vmem [resolvable:$true] %s74
    %77 = dma.hbm_to_vmem [thread:$0]  %s73, 16, %s75, %s64
    %s78 = sadd.s32 %s23, 3
    %s79 = smul.u32 %s78, 8
    %s80 = sld [smem:[#allocation6 + %s79]]
    %s81 = scalar_lea.hbm %s3, %s80
    %s82 = scalar_lea.vmem [#allocation3], 3
    %s83 = scalar_lea.sflag [#allocation4], 3
    // Predicated region
    $region22: #{tpu_custom_call.1} parent=1 // pred_check
      _
    $region23: #{tpu_custom_call.1} parent=1 // pred_check_branch
      %85 = sbr.rel target = $region25
    $region24: #{tpu_custom_call.1} parent=1 // pred_region
      %86 = sst [smem:[#allocation12]] [#allocation19]
      %87 = sst [smem:[#allocation13]] [#allocation18]
    $region25: #{tpu_custom_call.1} parent=1 // pred_fallthru
      _
    %89 = shalt.err (0)
    %s91 = sshll.u32 %s81, 4
    %s92 = int_to_ptr.hbm [resolvable:$true] %s91
    %s93 = sshll.u32 %s82, 4
    %s94 = int_to_ptr.vmem [resolvable:$true] %s93
    %96 = dma.hbm_to_vmem [thread:$0]  %s92, 16, %s94, %s83
    %s97 = sadd.s32 %s23, 4
    %s98 = smul.u32 %s97, 8
    %s99 = sld [smem:[#allocation6 + %s98]]
    %s100 = scalar_lea.hbm %s3, %s99
    %s101 = scalar_lea.vmem [#allocation3], 4
    %s102 = scalar_lea.sflag [#allocation4], 4
    // Predicated region
    $region26: #{tpu_custom_call.1} parent=1 // pred_check
      _
    $region27: #{tpu_custom_call.1} parent=1 // pred_check_branch
      %104 = sbr.rel target = $region29
    $region28: #{tpu_custom_call.1} parent=1 // pred_region
      %105 = sst [smem:[#allocation12]] [#allocation21]
      %106 = sst [smem:[#allocation13]] [#allocation20]
    $region29: #{tpu_custom_call.1} parent=1 // pred_fallthru
      _
    %108 = shalt.err (0)
    %s110 = sshll.u32 %s100, 4
    %s111 = int_to_ptr.hbm [resolvable:$true] %s110
    %s112 = sshll.u32 %s101, 4
    %s113 = int_to_ptr.vmem [resolvable:$true] %s112
    %115 = dma.hbm_to_vmem [thread:$0]  %s111, 16, %s113, %s102
    %s116 = sadd.s32 %s23, 5
    %s117 = smul.u32 %s116, 8
    %s118 = sld [smem:[#allocation6 + %s117]]
    %s119 = scalar_lea.hbm %s3, %s118
    %s120 = scalar_lea.vmem [#allocation3], 5
    %s121 = scalar_lea.sflag [#allocation4], 5
    // Predicated region
    $region30: #{tpu_custom_call.1} parent=1 // pred_check
      _
    $region31: #{tpu_custom_call.1} parent=1 // pred_check_branch
      %123 = sbr.rel target = $region33
    $region32: #{tpu_custom_call.1} parent=1 // pred_region
      %124 = sst [smem:[#allocation12]] [#allocation23]
      %125 = sst [smem:[#allocation13]] [#allocation22]
    $region33: #{tpu_custom_call.1} parent=1 // pred_fallthru
      _
    %127 = shalt.err (0)
    %s129 = sshll.u32 %s119, 4
    %s130 = int_to_ptr.hbm [resolvable:$true] %s129
    %s131 = sshll.u32 %s120, 4
    %s132 = int_to_ptr.vmem [resolvable:$true] %s131
    %134 = dma.hbm_to_vmem [thread:$0]  %s130, 16, %s132, %s121
    %s135 = sadd.s32 %s23, 6
    %s136 = smul.u32 %s135, 8
    %s137 = sld [smem:[#allocation6 + %s136]]
    %s138 = scalar_lea.hbm %s3, %s137
    %s139 = scalar_lea.vmem [#allocation3], 6
    %s140 = scalar_lea.sflag [#allocation4], 6
    // Predicated region
    $region34: #{tpu_custom_call.1} parent=1 // pred_check
      _
    $region35: #{tpu_custom_call.1} parent=1 // pred_check_branch
      %142 = sbr.rel target = $region37
    $region36: #{tpu_custom_call.1} parent=1 // pred_region
      %143 = sst [smem:[#allocation12]] [#allocation25]
      %144 = sst [smem:[#allocation13]] [#allocation24]
    $region37: #{tpu_custom_call.1} parent=1 // pred_fallthru
      _
    %146 = shalt.err (0)
    %s148 = sshll.u32 %s138, 4
    %s149 = int_to_ptr.hbm [resolvable:$true] %s148
    %s150 = sshll.u32 %s139, 4
    %s151 = int_to_ptr.vmem [resolvable:$true] %s150
    %153 = dma.hbm_to_vmem [thread:$0]  %s149, 16, %s151, %s140
    %s154 = sadd.s32 %s23, 7
    %s155 = smul.u32 %s154, 8
    %s156 = sld [smem:[#allocation6 + %s155]]
    %s157 = scalar_lea.hbm %s3, %s156
    %s158 = scalar_lea.vmem [#allocation3], 7
    %s159 = scalar_lea.sflag [#allocation4], 7
    // Predicated region
    $region38: #{tpu_custom_call.1} parent=1 // pred_check
      _
    $region39: #{tpu_custom_call.1} parent=1 // pred_check_branch
      %161 = sbr.rel target = $region41
    $region40: #{tpu_custom_call.1} parent=1 // pred_region
      %162 = sst [smem:[#allocation12]] [#allocation27]
      %163 = sst [smem:[#allocation13]] [#allocation26]
    $region41: #{tpu_custom_call.1} parent=1 // pred_fallthru
      _
    %165 = shalt.err (0)
    %s167 = sshll.u32 %s157, 4
    %s168 = int_to_ptr.hbm [resolvable:$true] %s167
    %s169 = sshll.u32 %s158, 4
    %s170 = int_to_ptr.vmem [resolvable:$true] %s169
    %172 = dma.hbm_to_vmem [thread:$0]  %s168, 16, %s170, %s159
    %173 = vst [vmem:[#allocation2] sm:$0xff] 0.0
    loop: start=0, step=1, limit=8
    $region42: #{tpu_custom_call.1} parent=1 // loop_pre_header
      _
    $region43: #{tpu_custom_call.1} parent=1 // loop_header
      %s175 = sphi 0, %s179
      %p176 = scmp.ge.s32.totalorder %s175, 8
    $region44: #{tpu_custom_call.1} parent=1 // loop_header_branch
      %178 = sbr.rel (%p176) target = $region48
    $region45: #{tpu_custom_call.1} parent=1 // loop_body
      %p180 = scmp.lt.s32.totalorder %s175, 0
      %s181 = ssub.s32 0, %s175
      %s182 = scalar_select %p180, %s181, %s175
      %s183 = sand.u32 %s182, 1
      %s184 = ssub.s32 0, %s183
      %s185 = scalar_select %p180, %s184, %s183
      %p186 = scmp.ne.s32.totalorder %s185, 0
      %p187 = scmp.lt.s32.totalorder %s185, 0
      %p188 = pnand %p187, %p186
      %p189 = pneg %p188
      %s190 = sadd.s32 %s185, 2
      %s191 = scalar_select %p189, %s190, %s185
      %s192 = smul.u32 %s191, 8
      %s193 = scalar_lea.sflag [#allocation4], %s192
      %195 = dma.done %s193, 16
      %s196 = sadd.s32 1, %s192
      %s197 = scalar_lea.sflag [#allocation4], %s196
      %199 = dma.done %s197, 16
      %s200 = sadd.s32 2, %s192
      %s201 = scalar_lea.sflag [#allocation4], %s200
      %203 = dma.done %s201, 16
      %s204 = sadd.s32 3, %s192
      %s205 = scalar_lea.sflag [#allocation4], %s204
      %207 = dma.done %s205, 16
      %s208 = sadd.s32 4, %s192
      %s209 = scalar_lea.sflag [#allocation4], %s208
      %211 = dma.done %s209, 16
      %s212 = sadd.s32 5, %s192
      %s213 = scalar_lea.sflag [#allocation4], %s212
      %215 = dma.done %s213, 16
      %s216 = sadd.s32 6, %s192
      %s217 = scalar_lea.sflag [#allocation4], %s216
      %219 = dma.done %s217, 16
      %s220 = sadd.s32 7, %s192
      %s221 = scalar_lea.sflag [#allocation4], %s220
      %223 = dma.done %s221, 16
      %s224 = sadd.s32 %s175, 1
      %p225 = scmp.lt.s32.totalorder %s224, 8
      // Predicated region
      $region49: #{tpu_custom_call.1} parent=45 // pred_check
        %p226 = pneg %p225
      $region50: #{tpu_custom_call.1} parent=45 // pred_check_branch
        %228 = sbr.rel (%p226) target = $region52
      $region51: #{tpu_custom_call.1} parent=45 // pred_region
        %p229 = scmp.lt.s32.totalorder %s224, 0
        %s230 = ssub.s32 0, %s224
        %s231 = scalar_select %p229, %s230, %s224
        %s232 = sand.u32 %s231, 1
        %s233 = ssub.s32 0, %s232
        %s234 = scalar_select %p229, %s233, %s232
        %p235 = scmp.ne.s32.totalorder %s234, 0
        %p236 = scmp.lt.s32.totalorder %s234, 0
        %p237 = pnand %p236, %p235
        %p238 = pneg %p237
        %s239 = sadd.s32 %s234, 2
        %s240 = scalar_select %p238, %s239, %s234
        %s241 = sadd.s32 %s24, %s224
        %s242 = sld [smem:[#allocation6 + %s241]]
        %s243 = scalar_lea.hbm %s3, %s242
        %s244 = smul.u32 %s240, 8
        %s245 = scalar_lea.vmem [#allocation3], %s244
        %s246 = scalar_lea.sflag [#allocation4], %s244
        // Predicated region
        $region53: #{tpu_custom_call.1} parent=51 // pred_check
          _
        $region54: #{tpu_custom_call.1} parent=51 // pred_check_branch
          %248 = sbr.rel target = $region56
        $region55: #{tpu_custom_call.1} parent=51 // pred_region
          %249 = sst [smem:[#allocation12]] [#allocation29]
          %250 = sst [smem:[#allocation13]] [#allocation28]
        $region56: #{tpu_custom_call.1} parent=51 // pred_fallthru
          _
        %252 = shalt.err (0)
        %s254 = sshll.u32 %s243, 4
        %s255 = int_to_ptr.hbm [resolvable:$true] %s254
        %s256 = sshll.u32 %s245, 4
        %s257 = int_to_ptr.vmem [resolvable:$true] %s256
        %259 = dma.hbm_to_vmem [thread:$0]  %s255, 16, %s257, %s246
        %s260 = sadd.s32 %s41, %s224
        %s261 = sld [smem:[#allocation6 + %s260]]
        %s262 = scalar_lea.hbm %s3, %s261
        %s263 = sadd.s32 1, %s244
        %s264 = scalar_lea.vmem [#allocation3], %s263
        %s265 = scalar_lea.sflag [#allocation4], %s263
        // Predicated region
        $region57: #{tpu_custom_call.1} parent=51 // pred_check
          _
        $region58: #{tpu_custom_call.1} parent=51 // pred_check_branch
          %267 = sbr.rel target = $region60
        $region59: #{tpu_custom_call.1} parent=51 // pred_region
          %268 = sst [smem:[#allocation12]] [#allocation31]
          %269 = sst [smem:[#allocation13]] [#allocation30]
        $region60: #{tpu_custom_call.1} parent=51 // pred_fallthru
          _
        %271 = shalt.err (0)
        %s273 = sshll.u32 %s262, 4
        %s274 = int_to_ptr.hbm [resolvable:$true] %s273
        %s275 = sshll.u32 %s264, 4
        %s276 = int_to_ptr.vmem [resolvable:$true] %s275
        %278 = dma.hbm_to_vmem [thread:$0]  %s274, 16, %s276, %s265
        %s279 = sadd.s32 %s60, %s224
        %s280 = sld [smem:[#allocation6 + %s279]]
        %s281 = scalar_lea.hbm %s3, %s280
        %s282 = sadd.s32 2, %s244
        %s283 = scalar_lea.vmem [#allocation3], %s282
        %s284 = scalar_lea.sflag [#allocation4], %s282
        // Predicated region
        $region61: #{tpu_custom_call.1} parent=51 // pred_check
          _
        $region62: #{tpu_custom_call.1} parent=51 // pred_check_branch
          %286 = sbr.rel target = $region64
        $region63: #{tpu_custom_call.1} parent=51 // pred_region
          %287 = sst [smem:[#allocation12]] [#allocation33]
          %288 = sst [smem:[#allocation13]] [#allocation32]
        $region64: #{tpu_custom_call.1} parent=51 // pred_fallthru
          _
        %290 = shalt.err (0)
        %s292 = sshll.u32 %s281, 4
        %s293 = int_to_ptr.hbm [resolvable:$true] %s292
        %s294 = sshll.u32 %s283, 4
        %s295 = int_to_ptr.vmem [resolvable:$true] %s294
        %297 = dma.hbm_to_vmem [thread:$0]  %s293, 16, %s295, %s284
        %s298 = sadd.s32 %s79, %s224
        %s299 = sld [smem:[#allocation6 + %s298]]
        %s300 = scalar_lea.hbm %s3, %s299
        %s301 = sadd.s32 3, %s244
        %s302 = scalar_lea.vmem [#allocation3], %s301
        %s303 = scalar_lea.sflag [#allocation4], %s301
        // Predicated region
        $region65: #{tpu_custom_call.1} parent=51 // pred_check
          _
        $region66: #{tpu_custom_call.1} parent=51 // pred_check_branch
          %305 = sbr.rel target = $region68
        $region67: #{tpu_custom_call.1} parent=51 // pred_region
          %306 = sst [smem:[#allocation12]] [#allocation35]
          %307 = sst [smem:[#allocation13]] [#allocation34]
        $region68: #{tpu_custom_call.1} parent=51 // pred_fallthru
          _
        %309 = shalt.err (0)
        %s311 = sshll.u32 %s300, 4
        %s312 = int_to_ptr.hbm [resolvable:$true] %s311
        %s313 = sshll.u32 %s302, 4
        %s314 = int_to_ptr.vmem [resolvable:$true] %s313
        %316 = dma.hbm_to_vmem [thread:$0]  %s312, 16, %s314, %s303
        %s317 = sadd.s32 %s98, %s224
        %s318 = sld [smem:[#allocation6 + %s317]]
        %s319 = scalar_lea.hbm %s3, %s318
        %s320 = sadd.s32 4, %s244
        %s321 = scalar_lea.vmem [#allocation3], %s320
        %s322 = scalar_lea.sflag [#allocation4], %s320
        // Predicated region
        $region69: #{tpu_custom_call.1} parent=51 // pred_check
          _
        $region70: #{tpu_custom_call.1} parent=51 // pred_check_branch
          %324 = sbr.rel target = $region72
        $region71: #{tpu_custom_call.1} parent=51 // pred_region
          %325 = sst [smem:[#allocation12]] [#allocation37]
          %326 = sst [smem:[#allocation13]] [#allocation36]
        $region72: #{tpu_custom_call.1} parent=51 // pred_fallthru
          _
        %328 = shalt.err (0)
        %s330 = sshll.u32 %s319, 4
        %s331 = int_to_ptr.hbm [resolvable:$true] %s330
        %s332 = sshll.u32 %s321, 4
        %s333 = int_to_ptr.vmem [resolvable:$true] %s332
        %335 = dma.hbm_to_vmem [thread:$0]  %s331, 16, %s333, %s322
        %s336 = sadd.s32 %s117, %s224
        %s337 = sld [smem:[#allocation6 + %s336]]
        %s338 = scalar_lea.hbm %s3, %s337
        %s339 = sadd.s32 5, %s244
        %s340 = scalar_lea.vmem [#allocation3], %s339
        %s341 = scalar_lea.sflag [#allocation4], %s339
        // Predicated region
        $region73: #{tpu_custom_call.1} parent=51 // pred_check
          _
        $region74: #{tpu_custom_call.1} parent=51 // pred_check_branch
          %343 = sbr.rel target = $region76
        $region75: #{tpu_custom_call.1} parent=51 // pred_region
          %344 = sst [smem:[#allocation12]] [#allocation39]
          %345 = sst [smem:[#allocation13]] [#allocation38]
        $region76: #{tpu_custom_call.1} parent=51 // pred_fallthru
          _
        %347 = shalt.err (0)
        %s349 = sshll.u32 %s338, 4
        %s350 = int_to_ptr.hbm [resolvable:$true] %s349
        %s351 = sshll.u32 %s340, 4
        %s352 = int_to_ptr.vmem [resolvable:$true] %s351
        %354 = dma.hbm_to_vmem [thread:$0]  %s350, 16, %s352, %s341
        %s355 = sadd.s32 %s136, %s224
        %s356 = sld [smem:[#allocation6 + %s355]]
        %s357 = scalar_lea.hbm %s3, %s356
        %s358 = sadd.s32 6, %s244
        %s359 = scalar_lea.vmem [#allocation3], %s358
        %s360 = scalar_lea.sflag [#allocation4], %s358
        // Predicated region
        $region77: #{tpu_custom_call.1} parent=51 // pred_check
          _
        $region78: #{tpu_custom_call.1} parent=51 // pred_check_branch
          %362 = sbr.rel target = $region80
        $region79: #{tpu_custom_call.1} parent=51 // pred_region
          %363 = sst [smem:[#allocation12]] [#allocation41]
          %364 = sst [smem:[#allocation13]] [#allocation40]
        $region80: #{tpu_custom_call.1} parent=51 // pred_fallthru
          _
        %366 = shalt.err (0)
        %s368 = sshll.u32 %s357, 4
        %s369 = int_to_ptr.hbm [resolvable:$true] %s368
        %s370 = sshll.u32 %s359, 4
        %s371 = int_to_ptr.vmem [resolvable:$true] %s370
        %373 = dma.hbm_to_vmem [thread:$0]  %s369, 16, %s371, %s360
        %s374 = sadd.s32 %s155, %s224
        %s375 = sld [smem:[#allocation6 + %s374]]
        %s376 = scalar_lea.hbm %s3, %s375
        %s377 = sadd.s32 7, %s244
        %s378 = scalar_lea.vmem [#allocation3], %s377
        %s379 = scalar_lea.sflag [#allocation4], %s377
        // Predicated region
        $region81: #{tpu_custom_call.1} parent=51 // pred_check
          _
        $region82: #{tpu_custom_call.1} parent=51 // pred_check_branch
          %381 = sbr.rel target = $region84
        $region83: #{tpu_custom_call.1} parent=51 // pred_region
          %382 = sst [smem:[#allocation12]] [#allocation43]
          %383 = sst [smem:[#allocation13]] [#allocation42]
        $region84: #{tpu_custom_call.1} parent=51 // pred_fallthru
          _
        %385 = shalt.err (0)
        %s387 = sshll.u32 %s376, 4
        %s388 = int_to_ptr.hbm [resolvable:$true] %s387
        %s389 = sshll.u32 %s378, 4
        %s390 = int_to_ptr.vmem [resolvable:$true] %s389
        %392 = dma.hbm_to_vmem [thread:$0]  %s388, 16, %s390, %s379
      $region52: #{tpu_custom_call.1} parent=45 // pred_fallthru
        _
      %v393 = vld [vmem:[#allocation2] sm:$0xff]
      %s394 = scalar_lea.vmem [#allocation3], %s192
      %v395 = vld [vmem:[%s394] sm:$0xff]
      %v396 = vadd.f32 %v393, %v395
      %397 = vst [vmem:[#allocation2] sm:$0xff] %v396
    $region46: #{tpu_custom_call.1} parent=1 // loop_footer
      %s179 = sadd.s32 1, %s175
    $region47: #{tpu_custom_call.1} parent=1 // loop_footer_branch
      %174 = sbr.rel target = $region43
    $region48: #{tpu_custom_call.1} parent=1 // loop_exit
      _
    %v398 = vld [vmem:[#allocation2] sm:$0xff]
    %v399 = vmul.f32 %v398, 0.125
    %v400 = vld [vmem:[%s1] sm:$0x1]
    %v402 = vperm.slane %v400, 0
    %v404 = vmul.f32 %v399, %v402
    %405 = vadd.xlane.f32.xlu0 %v404
    %v406 = vpop.xlane.xlu0 %405
    %s407 = sld [smem:[#allocation7]]
    %v408 = vstv %s407
    %v409 = vadd.f32 %v406, %v408
    %410 = vst [vmem:[#allocation8] sm:$0xff] %v409
    // Predicated region
    $region85: #{tpu_custom_call.1} parent=1 // pred_check
      _
    $region86: #{tpu_custom_call.1} parent=1 // pred_check_branch
      %412 = sbr.rel (0) target = $region88
    $region87: #{tpu_custom_call.1} parent=1 // pred_region
      %414 = vsyncadd [#allocation9], 0
      %s416 = sshll.u32 [#allocation8], 4
      %s417 = int_to_ptr.vmem [resolvable:$true] %s416
      %s418 = sshll.u32 %s4, 4
      %s419 = int_to_ptr.hbm [resolvable:$true] %s418
      %421 = dma.vmem_to_hbm [thread:$0]  %s417, 128, %s419, [#allocation9]
    $region88: #{tpu_custom_call.1} parent=1 // pred_fallthru
      _
    // Predicated region
    $region89: #{tpu_custom_call.1} parent=1 // pred_check
      _
    $region90: #{tpu_custom_call.1} parent=1 // pred_check_branch
      %423 = sbr.rel (0) target = $region92
    $region91: #{tpu_custom_call.1} parent=1 // pred_region
      %425 = dma.done [#allocation9], 128
    $region92: #{tpu_custom_call.1} parent=1 // pred_fallthru
      _
    %426 = vsyncpa [#allocation9], 1
  %427 = vsyncmov [#allocation4]
  %s428 = vpop.sfrf %427
  %p429 = scmp.eq.s32.totalorder %s428, 0
  %p430 = pneg %p429
  %432 = shalt.err (%p430)
  %s433 = scalar_lea.sflag [#allocation4], 1
  %434 = vsyncmov %s433
  %s435 = vpop.sfrf %434
  %p436 = scmp.eq.s32.totalorder %s435, 0
  %p437 = pneg %p436
  %439 = shalt.err (%p437)
  %s440 = scalar_lea.sflag [#allocation4], 2
  %441 = vsyncmov %s440
  %s442 = vpop.sfrf %441
  %p443 = scmp.eq.s32.totalorder %s442, 0
  %p444 = pneg %p443
  %446 = shalt.err (%p444)
  %s447 = scalar_lea.sflag [#allocation4], 3
  %448 = vsyncmov %s447
  %s449 = vpop.sfrf %448
  %p450 = scmp.eq.s32.totalorder %s449, 0
  %p451 = pneg %p450
  %453 = shalt.err (%p451)
  %s454 = scalar_lea.sflag [#allocation4], 4
  %455 = vsyncmov %s454
  %s456 = vpop.sfrf %455
  %p457 = scmp.eq.s32.totalorder %s456, 0
  %p458 = pneg %p457
  %460 = shalt.err (%p458)
  %s461 = scalar_lea.sflag [#allocation4], 5
  %462 = vsyncmov %s461
  %s463 = vpop.sfrf %462
  %p464 = scmp.eq.s32.totalorder %s463, 0
  %p465 = pneg %p464
  %467 = shalt.err (%p465)
  %s468 = scalar_lea.sflag [#allocation4], 6
  %469 = vsyncmov %s468
  %s470 = vpop.sfrf %469
  %p471 = scmp.eq.s32.totalorder %s470, 0
  %p472 = pneg %p471
  %474 = shalt.err (%p472)
  %s475 = scalar_lea.sflag [#allocation4], 7
  %476 = vsyncmov %s475
  %s477 = vpop.sfrf %476
  %p478 = scmp.eq.s32.totalorder %s477, 0
  %p479 = pneg %p478
  %481 = shalt.err (%p479)
  %s482 = scalar_lea.sflag [#allocation4], 8
  %483 = vsyncmov %s482
  %s484 = vpop.sfrf %483
  %p485 = scmp.eq.s32.totalorder %s484, 0
  %p486 = pneg %p485
  %488 = shalt.err (%p486)
  %s489 = scalar_lea.sflag [#allocation4], 9
  %490 = vsyncmov %s489
  %s491 = vpop.sfrf %490
  %p492 = scmp.eq.s32.totalorder %s491, 0
  %p493 = pneg %p492
  %495 = shalt.err (%p493)
  %s496 = scalar_lea.sflag [#allocation4], 10
  %497 = vsyncmov %s496
  %s498 = vpop.sfrf %497
  %p499 = scmp.eq.s32.totalorder %s498, 0
  %p500 = pneg %p499
  %502 = shalt.err (%p500)
  %s503 = scalar_lea.sflag [#allocation4], 11
  %504 = vsyncmov %s503
  %s505 = vpop.sfrf %504
  %p506 = scmp.eq.s32.totalorder %s505, 0
  %p507 = pneg %p506
  %509 = shalt.err (%p507)
  %s510 = scalar_lea.sflag [#allocation4], 12
  %511 = vsyncmov %s510
  %s512 = vpop.sfrf %511
  %p513 = scmp.eq.s32.totalorder %s512, 0
  %p514 = pneg %p513
  %516 = shalt.err (%p514)
  %s517 = scalar_lea.sflag [#allocation4], 13
  %518 = vsyncmov %s517
  %s519 = vpop.sfrf %518
  %p520 = scmp.eq.s32.totalorder %s519, 0
  %p521 = pneg %p520
  %523 = shalt.err (%p521)
  %s524 = scalar_lea.sflag [#allocation4], 14
  %525 = vsyncmov %s524
  %s526 = vpop.sfrf %525
  %p527 = scmp.eq.s32.totalorder %s526, 0
  %p528 = pneg %p527
  %530 = shalt.err (%p528)
  %s531 = scalar_lea.sflag [#allocation4], 15
  %532 = vsyncmov %s531
  %s533 = vpop.sfrf %532
  %p534 = scmp.eq.s32.totalorder %s533, 0
  %p535 = pneg %p534
  %537 = shalt.err (%p535)

</llo_original>
